<compile_context>
chip_gen: v7x
topology: tpu7x:2x2x1
jax: 0.10.0
libtpu: 0.0.40
codegen_flags: <defaults>
</compile_context>

<pallas_src>
import functools

import jax
import jax.numpy as jnp
from jax.experimental import pallas as pl
from jax.experimental.pallas import tpu as pltpu


# ---------------------------------------------------------------------------
# Kernel
# ---------------------------------------------------------------------------
def mlp_kernel(x_ref, w1_ref, b1_ref, w2_ref, b2_ref, o_ref):
    compute_dtype = w1_ref.dtype
    # In-kernel downcast of the f32 x tile to the MXU dtype (VPU work, hidden
    # under the MXU matmuls) -> avoids a separate XLA cast kernel + extra HBM
    # traffic for x.
    x = x_ref[...].astype(compute_dtype)

    # fc1 on the MXU, f32 accumulation.
    h = jnp.dot(x, w1_ref[...], preferred_element_type=jnp.float32)

    b1 = b1_ref[...]
    if b1.dtype == jnp.float32:
        # v5e path: no bf16 VPU -> f32 bias + ReLU, single downcast for fc2.
        h = jnp.maximum(h + b1, 0.0).astype(compute_dtype)
    else:
        # v6e/v7x path: bf16 epilogue halves vld/vst bytes and vreg pressure.
        h = jnp.maximum(h.astype(b1.dtype) + b1, 0.0)

    # fc2 on the MXU, f32 accumulation; bias add + (optional) downcast at store.
    out = jnp.dot(h.astype(compute_dtype), w2_ref[...],
                  preferred_element_type=jnp.float32)
    o_ref[...] = (out + b2_ref[...]).astype(o_ref.dtype)


# ---------------------------------------------------------------------------
# Device heuristics / tiling policy
# ---------------------------------------------------------------------------
def _tpu_traits():
    """Best-effort (two_tensorcores_per_device, is_v5e) from device_kind."""
    try:
        kind = jax.devices()[0].device_kind.lower()
    except Exception:  # non-TPU / unknown backend: conservative defaults
        return False, False
    is_v5e = ("v5e" in kind) or ("v5 lite" in kind) or ("v5lite" in kind)
    # v4 / v5p expose a megacore (2 TCs); v7x has 2 TensorCores per chip.
    multi_tc = (not is_v5e) and any(s in kind for s in ("v4", "v5p", "v5", "7x", "v7", "tpu7"))
    return multi_tc, is_v5e


def _pick_tile_b(B, I, H, O, *, min_steps, out_bytes, tile_budget_bytes=12 << 20):
    """Largest batch tile (multiple of 8) giving >= min_steps grid steps and a
    per-tile working set under the VMEM budget."""
    if B % 8 != 0:
        return B  # tiny/odd batch: single full-extent block (allowed by Pallas)

    def tile_bytes(t):
        # double-buffered f32 x tile + double-buffered out tile + hidden activ.
        return 2 * t * I * 4 + 2 * t * O * out_bytes + t * H * (4 + 2)

    cands = [t for t in (2048, 1024, 512, 256, 128, 64, 32, 16, 8)
             if t <= B and B % t == 0]
    for t in cands:
        if B // t >= min_steps and tile_bytes(t) <= tile_budget_bytes:
            return t
    return cands[-1] if cands else B


# ---------------------------------------------------------------------------
# Parameter prep (cast ONCE, outside the per-step call) + forward wrapper
# ---------------------------------------------------------------------------
def prepare_params(w1, b1, w2, b2, *, compute_dtype=jnp.bfloat16,
                   epilogue_dtype=None):
    """Cast/cache MXU-dtype weight copies once.  Weights are (in, out)."""
    if epilogue_dtype is None:
        _, is_v5e = _tpu_traits()
        epilogue_dtype = jnp.float32 if is_v5e else jnp.bfloat16
    H = w1.shape[1]
    O = w2.shape[1]
    return (w1.astype(compute_dtype),
            jnp.reshape(b1, (1, H)).astype(epilogue_dtype),
            w2.astype(compute_dtype),
            jnp.reshape(b2, (1, O)).astype(jnp.float32))


def catalyst_optimizer_forward(x, params, *, tile_b=None, out_dtype=None):
    """y = relu(x @ W1 + b1) @ W2 + b2, fused in a single Pallas kernel."""
    w1c, b1c, w2c, b2c = params
    B, I = x.shape
    H = w1c.shape[1]
    O = w2c.shape[1]
    out_dtype = x.dtype if out_dtype is None else out_dtype
    out_bytes = jnp.dtype(out_dtype).itemsize
    in_bytes = jnp.dtype(x.dtype).itemsize
    cd_bytes = jnp.dtype(w1c.dtype).itemsize

    multi_tc, _ = _tpu_traits()
    if tile_b is None:
        # >=4 steps on 2-TC devices (2 per core for within-core pipelining);
        # fewest/biggest tiles on single-TC chips (amortize ~0.35 us/step).
        tile_b = _pick_tile_b(B, I, H, O, min_steps=4 if multi_tc else 1,
                              out_bytes=out_bytes)
    assert B % tile_b == 0, "tile_b must divide B"
    assert tile_b % 8 == 0 or tile_b == B, "tile_b must be a multiple of 8"
    grid = (B // tile_b,)

    # Explicit scoped-VMEM limit (v5e default is only 16 MiB): resident weights
    # (single-buffered) + double-buffered x/out tiles + intermediates, with 2x
    # headroom, floored at 16 MiB and capped at 64 MiB (v7x physical).
    need = ((I * H + H * O) * cd_bytes + (H + O) * 4
            + 2 * tile_b * I * in_bytes
            + 2 * tile_b * O * out_bytes
            + tile_b * H * (4 + cd_bytes) + tile_b * O * 4)
    vmem_limit = min(max(2 * need + (4 << 20), 16 << 20), 64 << 20)

    cost = pl.CostEstimate(
        flops=2 * B * I * H + 2 * B * H * O,
        transcendentals=0,
        bytes_accessed=(B * I * in_bytes + (I * H + H * O) * cd_bytes
                        + H * jnp.dtype(b1c.dtype).itemsize + O * 4
                        + B * O * out_bytes),
    )

    def _call(single_buffer_weights):
        # Weights/biases have constant index_maps -> fetched once, resident in
        # VMEM; single-buffering them halves their footprint (matters on v7x).
        resident = ({"pipeline_mode": pl.Buffered(1)}
                    if single_buffer_weights else {})
        grid_spec = pltpu.PrefetchScalarGridSpec(
            num_scalar_prefetch=0,
            grid=grid,
            in_specs=[
                # x tile: f32, pipelined along the batch grid axis.
                pl.BlockSpec((tile_b, I), lambda i: (i, 0)),
                pl.BlockSpec((I, H), lambda i: (0, 0), **resident),   # W1
                pl.BlockSpec((1, H), lambda i: (0, 0), **resident),   # b1
                pl.BlockSpec((H, O), lambda i: (0, 0), **resident),   # W2
                pl.BlockSpec((1, O), lambda i: (0, 0), **resident),   # b2
            ],
            out_specs=pl.BlockSpec((tile_b, O), lambda i: (i, 0)),
        )
        return pl.pallas_call(
            mlp_kernel,
            out_shape=jax.ShapeDtypeStruct((B, O), out_dtype),
            grid_spec=grid_spec,
            compiler_params=pltpu.CompilerParams(
                dimension_semantics=("parallel",),
                vmem_limit_bytes=int(vmem_limit)),
            cost_estimate=cost,
        )(x, w1c, b1c, w2c, b2c)

    try:
        return _call(True)
    except Exception:
        # Fallback for JAX versions without pipeline_mode support on pallas_call
        # BlockSpecs: identical kernel, default (double) buffering on weights.
        return _call(False)


# ---------------------------------------------------------------------------
# References (matched precision, and loose f32 sanity check)
# ---------------------------------------------------------------------------
def _matched_reference(x, params):
    w1c, b1c, w2c, b2c = params
    cd = w1c.dtype
    h = jnp.dot(x.astype(cd), w1c, preferred_element_type=jnp.float32)
    if b1c.dtype == jnp.float32:
        h = jnp.maximum(h + b1c, 0.0).astype(cd)
    else:
        h = jnp.maximum(h.astype(b1c.dtype) + b1c, 0.0)
    return jnp.dot(h.astype(cd), w2c, preferred_element_type=jnp.float32) + b2c


if __name__ == "__main__":
    # Lane-dense demo shapes (multiples of 128; no masked stores / padded
    # vregs).  If model dims are tunable, prefer multiples of 256 on v6e/v7x.
    B, input_size, hidden_size, output_size = 512, 128, 256, 128

    key = jax.random.PRNGKey(0)
    kx, kw1, kb1, kw2, kb2 = jax.random.split(key, 5)

    x = jax.random.normal(kx, (B, input_size), dtype=jnp.float32)

    # Deterministic PyTorch-Linear-like uniform init, stored (in, out).
    bound1 = 1.0 / (input_size ** 0.5)
    bound2 = 1.0 / (hidden_size ** 0.5)
    w1 = jax.random.uniform(kw1, (input_size, hidden_size), jnp.float32, -bound1, bound1)
    b1 = jax.random.uniform(kb1, (hidden_size,), jnp.float32, -bound1, bound1)
    w2 = jax.random.uniform(kw2, (hidden_size, output_size), jnp.float32, -bound2, bound2)
    b2 = jax.random.uniform(kb2, (output_size,), jnp.float32, -bound2, bound2)

    # Cast / cache compute-dtype parameter copies ONCE (not per forward call).
    params = prepare_params(w1, b1, w2, b2)

    out = catalyst_optimizer_forward(x, params)
    out = jax.block_until_ready(out)
    assert out.shape == (B, output_size)

    # Matched-precision reference (same bf16 MXU inputs / epilogue path).
    ref = _matched_reference(x, params)
    assert jnp.allclose(out, ref, atol=1e-3, rtol=1e-3), "mismatch vs matched reference"

    # Loose sanity check vs pure-f32 math (bf16 MXU inputs => ~1e-2 level error).
    # TODO(synk): offer an f32 (or bf16x3) matmul path if bit parity with the
    # f32 PyTorch module is required.
    ref32 = jnp.maximum(x @ w1 + b1[None, :], 0.0) @ w2 + b2[None, :]
    assert jnp.allclose(out, ref32, atol=3e-2, rtol=5e-2), "mismatch vs f32 reference"

    print("KERNEL_OK")
</pallas_src>

<mosaic_0001>
module attributes {stable_mosaic.version = 11 : i64} {
  func.func @mlp_kernel(%arg0: i32, %arg1: memref<512x128xf32, #tpu.memory_space<vmem>>, %arg2: memref<128x256xbf16, #tpu.memory_space<vmem>>, %arg3: memref<1x256xbf16, #tpu.memory_space<vmem>>, %arg4: memref<256x128xbf16, #tpu.memory_space<vmem>>, %arg5: memref<1x128xf32, #tpu.memory_space<vmem>>, %arg6: memref<512x128xf32, #tpu.memory_space<vmem>>) attributes {dimension_semantics = [#tpu.dimension_semantics<parallel>], iteration_bounds = array<i64: 1>, scalar_prefetch = 0 : i64, scratch_operands = 0 : i64, tpu.core_type = #tpu.core_type<tc>, window_params = [{transform_indices = @transform_0, window_bounds = array<i64: 512, 128>}, {pipeline_mode = #tpu.pipeline_mode<synchronous>, transform_indices = @transform_1, window_bounds = array<i64: 128, 256>}, {pipeline_mode = #tpu.pipeline_mode<synchronous>, transform_indices = @transform_2, window_bounds = array<i64: 1, 256>}, {pipeline_mode = #tpu.pipeline_mode<synchronous>, transform_indices = @transform_3, window_bounds = array<i64: 256, 128>}, {pipeline_mode = #tpu.pipeline_mode<synchronous>, transform_indices = @transform_4, window_bounds = array<i64: 1, 128>}, {transform_indices = @transform_5, window_bounds = array<i64: 512, 128>}]} {
    %c0 = arith.constant 0 : index
    %c0_0 = arith.constant 0 : index
    %0 = vector.load %arg1[%c0, %c0_0] : memref<512x128xf32, #tpu.memory_space<vmem>>, vector<512x128xf32>
    %1 = arith.truncf %0 : vector<512x128xf32> to vector<512x128xbf16>
    %c0_1 = arith.constant 0 : index
    %c0_2 = arith.constant 0 : index
    %2 = vector.load %arg2[%c0_1, %c0_2] : memref<128x256xbf16, #tpu.memory_space<vmem>>, vector<128x256xbf16>
    %cst = arith.constant dense<0.000000e+00> : vector<512x256xf32>
    %3 = tpu.matmul %1, %2, %cst {dimension_numbers = #tpu.dot_dimension_numbers<[1], [0], [0], [1], [0, 0, 1, 1], [], []>} : vector<512x128xbf16>, vector<128x256xbf16>, vector<512x256xf32> -> vector<512x256xf32>
    %c0_3 = arith.constant 0 : index
    %c0_4 = arith.constant 0 : index
    %4 = vector.load %arg3[%c0_3, %c0_4] : memref<1x256xbf16, #tpu.memory_space<vmem>>, vector<1x256xbf16>
    %5 = arith.truncf %3 : vector<512x256xf32> to vector<512x256xbf16>
    %6 = vector.broadcast %4 : vector<1x256xbf16> to vector<512x256xbf16>
    %7 = arith.addf %5, %6 : vector<512x256xbf16>
    %cst_5 = arith.constant 0.000000e+00 : bf16
    %8 = vector.broadcast %cst_5 : bf16 to vector<512x256xbf16>
    %9 = arith.maximumf %7, %8 : vector<512x256xbf16>
    %c0_6 = arith.constant 0 : index
    %c0_7 = arith.constant 0 : index
    %10 = vector.load %arg4[%c0_6, %c0_7] : memref<256x128xbf16, #tpu.memory_space<vmem>>, vector<256x128xbf16>
    %cst_8 = arith.constant dense<0.000000e+00> : vector<512x128xf32>
    %11 = tpu.matmul %9, %10, %cst_8 {dimension_numbers = #tpu.dot_dimension_numbers<[1], [0], [0], [1], [0, 0, 1, 1], [], []>} : vector<512x256xbf16>, vector<256x128xbf16>, vector<512x128xf32> -> vector<512x128xf32>
    %c0_9 = arith.constant 0 : index
    %c0_10 = arith.constant 0 : index
    %12 = vector.load %arg5[%c0_9, %c0_10] : memref<1x128xf32, #tpu.memory_space<vmem>>, vector<1x128xf32>
    %13 = vector.broadcast %12 : vector<1x128xf32> to vector<512x128xf32>
    %14 = arith.addf %11, %13 : vector<512x128xf32>
    %c0_11 = arith.constant 0 : index
    %c0_12 = arith.constant 0 : index
    %15 = vector.load %arg6[%c0_11, %c0_12] : memref<512x128xf32, #tpu.memory_space<vmem>>, vector<512x128xf32>
    tpu.vector_store %arg6[%c0_11, %c0_12], %14 {strides = array<i32>} : memref<512x128xf32, #tpu.memory_space<vmem>>, vector<512x128xf32>,
    return
  }
  func.func @transform_0(%arg0: i32) -> (i32, i32) {
    %c0_i32 = arith.constant 0 : i32
    %c0_i32_0 = arith.constant 0 : i32
    return %arg0, %c0_i32 : i32, i32
  }
  func.func @transform_1(%arg0: i32) -> (i32, i32) {
    %c0_i32 = arith.constant 0 : i32
    %c0_i32_0 = arith.constant 0 : i32
    %c0_i32_1 = arith.constant 0 : i32
    return %c0_i32, %c0_i32_0 : i32, i32
  }
  func.func @transform_2(%arg0: i32) -> (i32, i32) {
    %c0_i32 = arith.constant 0 : i32
    %c0_i32_0 = arith.constant 0 : i32
    %c0_i32_1 = arith.constant 0 : i32
    return %c0_i32, %c0_i32_0 : i32, i32
  }
  func.func @transform_3(%arg0: i32) -> (i32, i32) {
    %c0_i32 = arith.constant 0 : i32
    %c0_i32_0 = arith.constant 0 : i32
    %c0_i32_1 = arith.constant 0 : i32
    return %c0_i32, %c0_i32_0 : i32, i32
  }
  func.func @transform_4(%arg0: i32) -> (i32, i32) {
    %c0_i32 = arith.constant 0 : i32
    %c0_i32_0 = arith.constant 0 : i32
    %c0_i32_1 = arith.constant 0 : i32
    return %c0_i32, %c0_i32_0 : i32, i32
  }
  func.func @transform_5(%arg0: i32) -> (i32, i32) {
    %c0_i32 = arith.constant 0 : i32
    %c0_i32_0 = arith.constant 0 : i32
    return %arg0, %c0_i32 : i32, i32
  }
}

module attributes {stable_mosaic.version = 11 : i64} {
  func.func @mlp_kernel(%arg0: i32, %arg1: memref<512x128xf32, #tpu.memory_space<vmem>>, %arg2: memref<128x256xbf16, #tpu.memory_space<vmem>>, %arg3: memref<1x256xbf16, #tpu.memory_space<vmem>>, %arg4: memref<256x128xbf16, #tpu.memory_space<vmem>>, %arg5: memref<1x128xf32, #tpu.memory_space<vmem>>, %arg6: memref<512x128xf32, #tpu.memory_space<vmem>>) attributes {dimension_semantics = [#tpu.dimension_semantics<parallel>], iteration_bounds = array<i64: 1>, scalar_prefetch = 0 : i64, scratch_operands = 0 : i64, tpu.core_type = #tpu.core_type<tc>, window_params = [{transform_indices = @transform_0, window_bounds = array<i64: 512, 128>}, {pipeline_mode = #tpu.pipeline_mode<synchronous>, transform_indices = @transform_1, window_bounds = array<i64: 128, 256>}, {pipeline_mode = #tpu.pipeline_mode<synchronous>, transform_indices = @transform_2, window_bounds = array<i64: 1, 256>}, {pipeline_mode = #tpu.pipeline_mode<synchronous>, transform_indices = @transform_3, window_bounds = array<i64: 256, 128>}, {pipeline_mode = #tpu.pipeline_mode<synchronous>, transform_indices = @transform_4, window_bounds = array<i64: 1, 128>}, {transform_indices = @transform_5, window_bounds = array<i64: 512, 128>}]} {
    %c0 = arith.constant 0 : index
    %c0_0 = arith.constant 0 : index
    %0 = vector.load %arg1[%c0, %c0_0] : memref<512x128xf32, #tpu.memory_space<vmem>>, vector<512x128xf32>
    %1 = arith.truncf %0 : vector<512x128xf32> to vector<512x128xbf16>
    %c0_1 = arith.constant 0 : index
    %c0_2 = arith.constant 0 : index
    %2 = vector.load %arg2[%c0_1, %c0_2] : memref<128x256xbf16, #tpu.memory_space<vmem>>, vector<128x256xbf16>
    %cst = arith.constant dense<0.000000e+00> : vector<512x256xf32>
    %3 = tpu.matmul %1, %2, %cst {dimension_numbers = #tpu.dot_dimension_numbers<[1], [0], [0], [1], [0, 0, 1, 1], [], []>} : vector<512x128xbf16>, vector<128x256xbf16>, vector<512x256xf32> -> vector<512x256xf32>
    %c0_3 = arith.constant 0 : index
    %c0_4 = arith.constant 0 : index
    %4 = vector.load %arg3[%c0_3, %c0_4] : memref<1x256xbf16, #tpu.memory_space<vmem>>, vector<1x256xbf16>
    %5 = arith.truncf %3 : vector<512x256xf32> to vector<512x256xbf16>
    %6 = vector.broadcast %4 : vector<1x256xbf16> to vector<512x256xbf16>
    %7 = arith.addf %5, %6 : vector<512x256xbf16>
    %cst_5 = arith.constant 0.000000e+00 : bf16
    %8 = vector.broadcast %cst_5 : bf16 to vector<512x256xbf16>
    %9 = arith.maximumf %7, %8 : vector<512x256xbf16>
    %c0_6 = arith.constant 0 : index
    %c0_7 = arith.constant 0 : index
    %10 = vector.load %arg4[%c0_6, %c0_7] : memref<256x128xbf16, #tpu.memory_space<vmem>>, vector<256x128xbf16>
    %cst_8 = arith.constant dense<0.000000e+00> : vector<512x128xf32>
    %11 = tpu.matmul %9, %10, %cst_8 {dimension_numbers = #tpu.dot_dimension_numbers<[1], [0], [0], [1], [0, 0, 1, 1], [], []>} : vector<512x256xbf16>, vector<256x128xbf16>, vector<512x128xf32> -> vector<512x128xf32>
    %c0_9 = arith.constant 0 : index
    %c0_10 = arith.constant 0 : index
    %12 = vector.load %arg5[%c0_9, %c0_10] : memref<1x128xf32, #tpu.memory_space<vmem>>, vector<1x128xf32>
    %13 = vector.broadcast %12 : vector<1x128xf32> to vector<512x128xf32>
    %14 = arith.addf %11, %13 : vector<512x128xf32>
    %c0_11 = arith.constant 0 : index
    %c0_12 = arith.constant 0 : index
    %15 = vector.load %arg6[%c0_11, %c0_12] : memref<512x128xf32, #tpu.memory_space<vmem>>, vector<512x128xf32>
    tpu.vector_store %arg6[%c0_11, %c0_12], %14 {strides = array<i32>} : memref<512x128xf32, #tpu.memory_space<vmem>>, vector<512x128xf32>,
    return
  }
  func.func @transform_0(%arg0: i32) -> (i32, i32) {
    %c0_i32 = arith.constant 0 : i32
    %c0_i32_0 = arith.constant 0 : i32
    return %arg0, %c0_i32 : i32, i32
  }
  func.func @transform_1(%arg0: i32) -> (i32, i32) {
    %c0_i32 = arith.constant 0 : i32
    %c0_i32_0 = arith.constant 0 : i32
    %c0_i32_1 = arith.constant 0 : i32
    return %c0_i32, %c0_i32_0 : i32, i32
  }
  func.func @transform_2(%arg0: i32) -> (i32, i32) {
    %c0_i32 = arith.constant 0 : i32
    %c0_i32_0 = arith.constant 0 : i32
    %c0_i32_1 = arith.constant 0 : i32
    return %c0_i32, %c0_i32_0 : i32, i32
  }
  func.func @transform_3(%arg0: i32) -> (i32, i32) {
    %c0_i32 = arith.constant 0 : i32
    %c0_i32_0 = arith.constant 0 : i32
    %c0_i32_1 = arith.constant 0 : i32
    return %c0_i32, %c0_i32_0 : i32, i32
  }
  func.func @transform_4(%arg0: i32) -> (i32, i32) {
    %c0_i32 = arith.constant 0 : i32
    %c0_i32_0 = arith.constant 0 : i32
    %c0_i32_1 = arith.constant 0 : i32
    return %c0_i32, %c0_i32_0 : i32, i32
  }
  func.func @transform_5(%arg0: i32) -> (i32, i32) {
    %c0_i32 = arith.constant 0 : i32
    %c0_i32_0 = arith.constant 0 : i32
    return %arg0, %c0_i32 : i32, i32
  }
}

</mosaic_0001>

<llo_original>
// kernel: tpu_custom_call.1
$region0: #{tpu_custom_call.1}
  #allocation0 [shape = 'u32[]', space=smem, size = 0x4, offset = 0x4, fixed_abs, tag = 'smem constant byte address 0x4 - core index']
  #allocation1 [shape = 'u32[144,128]{1,0:T(1,128)}', space=vmem, size = 0x12000, scoped, tag = 'internal scratch']
  %s0 = inlined_call_operand.hbm [shape: f32[512,128], index: 0, kind: input, shape index: {}]
  %s1 = inlined_call_operand.hbm [shape: bf16[128,256], index: 1, kind: input, shape index: {}]
  %s2 = inlined_call_operand.vmem [shape: bf16[1,256], index: 2, kind: input, shape index: {}]
  %s3 = inlined_call_operand.hbm [shape: bf16[256,128], index: 3, kind: input, shape index: {}]
  %s4 = inlined_call_operand.vmem [shape: f32[1,128], index: 4, kind: input, shape index: {}]
  %s5 = inlined_call_operand.hbm [shape: f32[512,128], index: 5, kind: output, shape index: {}]
  %s6 = sld [smem:[#allocation0]]
  $region42: #{tpu_custom_call.1} parent=0
    _
  %s8 = ssub.s32 1, %s6
  %s9 = scalar_select 0, %s8, %s6
  $region1: #{tpu_custom_call.1} parent=0
    #allocation2 [shape = 'u8[262144]{0}', space=vmem, size = 0x40000, scoped, tag = 'input window, operand 0, single buffered']
    #allocation3 [shape = 's32[1]{0}', space=sflag, size = 0x4, scoped, tag = 'scoped memory for tpu_custom_call.1']
    #allocation4 [shape = 's32[1]{0}', space=sflag, size = 0x4, scoped, tag = 'scoped memory for tpu_custom_call.1']
    #allocation5 [shape = 'u8[65536]{0}', space=vmem, size = 0x10000, scoped, tag = 'input window, operand 1, single buffered']
    #allocation6 [shape = 's32[1]{0}', space=sflag, size = 0x4, scoped, tag = 'scoped memory for tpu_custom_call.1']
    #allocation7 [shape = 'u8[65536]{0}', space=vmem, size = 0x10000, scoped, tag = 'input window, operand 3, single buffered']
    #allocation8 [shape = 'u8[262144]{0}', space=vmem, size = 0x40000, scoped, tag = 'output window, operand 0, single buffered']
    %10 = vsyncpa [#allocation3], 0
    %11 = vsyncpa [#allocation6], 0
    %12 = vsyncpa [#allocation4], 0
    // Predicated region
    $region2: #{tpu_custom_call.1} parent=1 // pred_check
      _
    $region3: #{tpu_custom_call.1} parent=1 // pred_check_branch
      %14 = sbr.rel (0) target = $region5
    $region4: #{tpu_custom_call.1} parent=1 // pred_region
      %s16 = ssub.s32 8192, 8192
      %17 = vsyncadd [#allocation3], %s16
      %s18 = sshll.u32 [#allocation2], 4
      %s19 = int_to_ptr.vmem [resolvable:$true] %s18
      %24 = dma.hbm_to_vmem [thread:$0]  %s0, 8192, %s19, [#allocation3], 128, 128, 8
    $region5: #{tpu_custom_call.1} parent=1 // pred_fallthru
      _
    // Predicated region
    $region6: #{tpu_custom_call.1} parent=1 // pred_check
      _
    $region7: #{tpu_custom_call.1} parent=1 // pred_check_branch
      %26 = sbr.rel (0) target = $region9
    $region8: #{tpu_custom_call.1} parent=1 // pred_region
      %s28 = ssub.s32 2048, 2048
      %29 = vsyncadd [#allocation6], %s28
      %s30 = sshll.u32 [#allocation5], 4
      %s31 = int_to_ptr.vmem [resolvable:$true] %s30
      %36 = dma.hbm_to_vmem [thread:$0]  %s1, 2048, %s31, [#allocation6], 128, 128, 8
    $region9: #{tpu_custom_call.1} parent=1 // pred_fallthru
      _
    // Predicated region
    $region10: #{tpu_custom_call.1} parent=1 // pred_check
      _
    $region11: #{tpu_custom_call.1} parent=1 // pred_check_branch
      %38 = sbr.rel (0) target = $region13
    $region12: #{tpu_custom_call.1} parent=1 // pred_region
      _
    $region13: #{tpu_custom_call.1} parent=1 // pred_fallthru
      _
    // Predicated region
    $region14: #{tpu_custom_call.1} parent=1 // pred_check
      _
    $region15: #{tpu_custom_call.1} parent=1 // pred_check_branch
      %40 = sbr.rel (0) target = $region17
    $region16: #{tpu_custom_call.1} parent=1 // pred_region
      %s42 = ssub.s32 2048, 2048
      %43 = vsyncadd [#allocation6], %s42
      %s44 = sshll.u32 [#allocation7], 4
      %s45 = int_to_ptr.vmem [resolvable:$true] %s44
      %50 = dma.hbm_to_vmem [thread:$0]  %s3, 2048, %s45, [#allocation6], 64, 64, 4
    $region17: #{tpu_custom_call.1} parent=1 // pred_fallthru
      _
    // Predicated region
    $region18: #{tpu_custom_call.1} parent=1 // pred_check
      _
    $region19: #{tpu_custom_call.1} parent=1 // pred_check_branch
      %52 = sbr.rel (0) target = $region21
    $region20: #{tpu_custom_call.1} parent=1 // pred_region
      _
    $region21: #{tpu_custom_call.1} parent=1 // pred_fallthru
      _
    // Predicated region
    $region22: #{tpu_custom_call.1} parent=1 // pred_check
      _
    $region23: #{tpu_custom_call.1} parent=1 // pred_check_branch
      %54 = sbr.rel (0) target = $region25
    $region24: #{tpu_custom_call.1} parent=1 // pred_region
      %55 = dma.done [#allocation3], 8192
    $region25: #{tpu_custom_call.1} parent=1 // pred_fallthru
      _
    // Predicated region
    $region26: #{tpu_custom_call.1} parent=1 // pred_check
      _
    $region27: #{tpu_custom_call.1} parent=1 // pred_check_branch
      %57 = sbr.rel (0) target = $region29
    $region28: #{tpu_custom_call.1} parent=1 // pred_region
      %58 = dma.done [#allocation6], 2048
    $region29: #{tpu_custom_call.1} parent=1 // pred_fallthru
      _
    // Predicated region
    $region30: #{tpu_custom_call.1} parent=1 // pred_check
      _
    $region31: #{tpu_custom_call.1} parent=1 // pred_check_branch
      %60 = sbr.rel (0) target = $region33
    $region32: #{tpu_custom_call.1} parent=1 // pred_region
      %61 = dma.done [#allocation6], 2048
    $region33: #{tpu_custom_call.1} parent=1 // pred_fallthru
      _
    %v63 = vld [vmem:[#allocation2] sm:$0xff]
    %v64 = vld [vmem:[#allocation2 + $0x8] sm:$0xff]
    %v65 = vld [vmem:[#allocation2 + $0x10] sm:$0xff]
    %v66 = vld [vmem:[#allocation2 + $0x18] sm:$0xff]
    %v67 = vld [vmem:[#allocation2 + $0x20] sm:$0xff]
    %v68 = vld [vmem:[#allocation2 + $0x28] sm:$0xff]
    %v69 = vld [vmem:[#allocation2 + $0x30] sm:$0xff]
    %v70 = vld [vmem:[#allocation2 + $0x38] sm:$0xff]
    %v71 = vld [vmem:[#allocation2 + $0x40] sm:$0xff]
    %v72 = vld [vmem:[#allocation2 + $0x48] sm:$0xff]
    %v73 = vld [vmem:[#allocation2 + $0x50] sm:$0xff]
    %v74 = vld [vmem:[#allocation2 + $0x58] sm:$0xff]
    %v75 = vld [vmem:[#allocation2 + $0x60] sm:$0xff]
    %v76 = vld [vmem:[#allocation2 + $0x68] sm:$0xff]
    %v77 = vld [vmem:[#allocation2 + $0x70] sm:$0xff]
    %v78 = vld [vmem:[#allocation2 + $0x78] sm:$0xff]
    %v79 = vld [vmem:[#allocation2 + $0x80] sm:$0xff]
    %v80 = vld [vmem:[#allocation2 + $0x88] sm:$0xff]
    %v81 = vld [vmem:[#allocation2 + $0x90] sm:$0xff]
    %v82 = vld [vmem:[#allocation2 + $0x98] sm:$0xff]
    %v83 = vld [vmem:[#allocation2 + $0xa0] sm:$0xff]
    %v84 = vld [vmem:[#allocation2 + $0xa8] sm:$0xff]
    %v85 = vld [vmem:[#allocation2 + $0xb0] sm:$0xff]
    %v86 = vld [vmem:[#allocation2 + $0xb8] sm:$0xff]
    %v87 = vld [vmem:[#allocation2 + $0xc0] sm:$0xff]
    %v88 = vld [vmem:[#allocation2 + $0xc8] sm:$0xff]
    %v89 = vld [vmem:[#allocation2 + $0xd0] sm:$0xff]
    %v90 = vld [vmem:[#allocation2 + $0xd8] sm:$0xff]
    %v91 = vld [vmem:[#allocation2 + $0xe0] sm:$0xff]
    %v92 = vld [vmem:[#allocation2 + $0xe8] sm:$0xff]
    %v93 = vld [vmem:[#allocation2 + $0xf0] sm:$0xff]
    %v94 = vld [vmem:[#allocation2 + $0xf8] sm:$0xff]
    %v95 = vld [vmem:[#allocation2 + $0x100] sm:$0xff]
    %v96 = vld [vmem:[#allocation2 + $0x108] sm:$0xff]
    %v97 = vld [vmem:[#allocation2 + $0x110] sm:$0xff]
    %v98 = vld [vmem:[#allocation2 + $0x118] sm:$0xff]
    %v99 = vld [vmem:[#allocation2 + $0x120] sm:$0xff]
    %v100 = vld [vmem:[#allocation2 + $0x128] sm:$0xff]
    %v101 = vld [vmem:[#allocation2 + $0x130] sm:$0xff]
    %v102 = vld [vmem:[#allocation2 + $0x138] sm:$0xff]
    %v103 = vld [vmem:[#allocation2 + $0x140] sm:$0xff]
    %v104 = vld [vmem:[#allocation2 + $0x148] sm:$0xff]
    %v105 = vld [vmem:[#allocation2 + $0x150] sm:$0xff]
    %v106 = vld [vmem:[#allocation2 + $0x158] sm:$0xff]
    %v107 = vld [vmem:[#allocation2 + $0x160] sm:$0xff]
    %v108 = vld [vmem:[#allocation2 + $0x168] sm:$0xff]
    %v109 = vld [vmem:[#allocation2 + $0x170] sm:$0xff]
    %v110 = vld [vmem:[#allocation2 + $0x178] sm:$0xff]
    %v111 = vld [vmem:[#allocation2 + $0x180] sm:$0xff]
    %v112 = vld [vmem:[#allocation2 + $0x188] sm:$0xff]
    %v113 = vld [vmem:[#allocation2 + $0x190] sm:$0xff]
    %v114 = vld [vmem:[#allocation2 + $0x198] sm:$0xff]
    %v115 = vld [vmem:[#allocation2 + $0x1a0] sm:$0xff]
    %v116 = vld [vmem:[#allocation2 + $0x1a8] sm:$0xff]
    %v117 = vld [vmem:[#allocation2 + $0x1b0] sm:$0xff]
    %v118 = vld [vmem:[#allocation2 + $0x1b8] sm:$0xff]
    %v119 = vld [vmem:[#allocation2 + $0x1c0] sm:$0xff]
    %v120 = vld [vmem:[#allocation2 + $0x1c8] sm:$0xff]
    %v121 = vld [vmem:[#allocation2 + $0x1d0] sm:$0xff]
    %v122 = vld [vmem:[#allocation2 + $0x1d8] sm:$0xff]
    %v123 = vld [vmem:[#allocation2 + $0x1e0] sm:$0xff]
    %v124 = vld [vmem:[#allocation2 + $0x1e8] sm:$0xff]
    %v125 = vld [vmem:[#allocation2 + $0x1f0] sm:$0xff]
    %v126 = vld [vmem:[#allocation2 + $0x1f8] sm:$0xff]
    %v127 = vpack.c.bf16 %v64, %v63
    %v128 = vpack.c.bf16 %v66, %v65
    %v129 = vpack.c.bf16 %v68, %v67
    %v130 = vpack.c.bf16 %v70, %v69
    %v131 = vpack.c.bf16 %v72, %v71
    %v132 = vpack.c.bf16 %v74, %v73
    %v133 = vpack.c.bf16 %v76, %v75
    %v134 = vpack.c.bf16 %v78, %v77
    %v135 = vpack.c.bf16 %v80, %v79
    %v136 = vpack.c.bf16 %v82, %v81
    %v137 = vpack.c.bf16 %v84, %v83
    %v138 = vpack.c.bf16 %v86, %v85
    %v139 = vpack.c.bf16 %v88, %v87
    %v140 = vpack.c.bf16 %v90, %v89
    %v141 = vpack.c.bf16 %v92, %v91
    %v142 = vpack.c.bf16 %v94, %v93
    %v143 = vpack.c.bf16 %v96, %v95
    %v144 = vpack.c.bf16 %v98, %v97
    %v145 = vpack.c.bf16 %v100, %v99
    %v146 = vpack.c.bf16 %v102, %v101
    %v147 = vpack.c.bf16 %v104, %v103
    %v148 = vpack.c.bf16 %v106, %v105
    %v149 = vpack.c.bf16 %v108, %v107
    %v150 = vpack.c.bf16 %v110, %v109
    %v151 = vpack.c.bf16 %v112, %v111
    %v152 = vpack.c.bf16 %v114, %v113
    %v153 = vpack.c.bf16 %v116, %v115
    %v154 = vpack.c.bf16 %v118, %v117
    %v155 = vpack.c.bf16 %v120, %v119
    %v156 = vpack.c.bf16 %v122, %v121
    %v157 = vpack.c.bf16 %v124, %v123
    %v158 = vpack.c.bf16 %v126, %v125
    %v159 = vld [vmem:[#allocation5] sm:$0xff]
    %v160 = vld [vmem:[#allocation5 + $0x8] sm:$0xff]
    %v161 = vld [vmem:[#allocation5 + $0x10] sm:$0xff]
    %v162 = vld [vmem:[#allocation5 + $0x18] sm:$0xff]
    %v163 = vld [vmem:[#allocation5 + $0x20] sm:$0xff]
    %v164 = vld [vmem:[#allocation5 + $0x28] sm:$0xff]
    %v165 = vld [vmem:[#allocation5 + $0x30] sm:$0xff]
    %v166 = vld [vmem:[#allocation5 + $0x38] sm:$0xff]
    %v167 = vld [vmem:[#allocation5 + $0x40] sm:$0xff]
    %v168 = vld [vmem:[#allocation5 + $0x48] sm:$0xff]
    %v169 = vld [vmem:[#allocation5 + $0x50] sm:$0xff]
    %v170 = vld [vmem:[#allocation5 + $0x58] sm:$0xff]
    %v171 = vld [vmem:[#allocation5 + $0x60] sm:$0xff]
    %v172 = vld [vmem:[#allocation5 + $0x68] sm:$0xff]
    %v173 = vld [vmem:[#allocation5 + $0x70] sm:$0xff]
    %v174 = vld [vmem:[#allocation5 + $0x78] sm:$0xff]
    %v191 = vunpack.c.l.b16 %v159
    %v192 = vunpack.c.h.b16 %v159
    %v193 = vunpack.c.l.b16 %v160
    %v194 = vunpack.c.h.b16 %v160
    %v195 = vunpack.c.l.b16 %v161
    %v196 = vunpack.c.h.b16 %v161
    %v197 = vunpack.c.l.b16 %v162
    %v198 = vunpack.c.h.b16 %v162
    %v199 = vunpack.c.l.b16 %v163
    %v200 = vunpack.c.h.b16 %v163
    %v201 = vunpack.c.l.b16 %v164
    %v202 = vunpack.c.h.b16 %v164
    %v203 = vunpack.c.l.b16 %v165
    %v204 = vunpack.c.h.b16 %v165
    %v205 = vunpack.c.l.b16 %v166
    %v206 = vunpack.c.h.b16 %v166
    %v207 = vunpack.c.l.b16 %v167
    %v208 = vunpack.c.h.b16 %v167
    %v209 = vunpack.c.l.b16 %v168
    %v210 = vunpack.c.h.b16 %v168
    %v211 = vunpack.c.l.b16 %v169
    %v212 = vunpack.c.h.b16 %v169
    %v213 = vunpack.c.l.b16 %v170
    %v214 = vunpack.c.h.b16 %v170
    %v215 = vunpack.c.l.b16 %v171
    %v216 = vunpack.c.h.b16 %v171
    %v217 = vunpack.c.l.b16 %v172
    %v218 = vunpack.c.h.b16 %v172
    %v219 = vunpack.c.l.b16 %v173
    %v220 = vunpack.c.h.b16 %v173
    %v221 = vunpack.c.l.b16 %v174
    %v222 = vunpack.c.h.b16 %v174
    %v223 = vpack.c.b16 %v193, %v191
    %v224 = vpack.c.b16 %v194, %v192
    %v225 = vpack.c.b16 %v197, %v195
    %v226 = vpack.c.b16 %v198, %v196
    %v227 = vpack.c.b16 %v201, %v199
    %v228 = vpack.c.b16 %v202, %v200
    %v229 = vpack.c.b16 %v205, %v203
    %v230 = vpack.c.b16 %v206, %v204
    %v231 = vpack.c.b16 %v209, %v207
    %v232 = vpack.c.b16 %v210, %v208
    %v233 = vpack.c.b16 %v213, %v211
    %v234 = vpack.c.b16 %v214, %v212
    %v235 = vpack.c.b16 %v217, %v215
    %v236 = vpack.c.b16 %v218, %v216
    %v237 = vpack.c.b16 %v221, %v219
    %v238 = vpack.c.b16 %v222, %v220
    %255 = vmatprep.subr.bf16.mxu0 %v224
    %256 = vmatpush1.bf16.msra.mxu0 %v223
    %257 = vmatprep.subr.bf16.mxu0 %v226
    %258 = vmatpush1.bf16.msra.mxu0 %v225
    %259 = vmatprep.subr.bf16.mxu0 %v228
    %260 = vmatpush1.bf16.msra.mxu0 %v227
    %261 = vmatprep.subr.bf16.mxu0 %v230
    %262 = vmatpush1.bf16.msra.mxu0 %v229
    %263 = vmatprep.subr.bf16.mxu0 %v232
    %264 = vmatpush1.bf16.msra.mxu0 %v231
    %265 = vmatprep.subr.bf16.mxu0 %v234
    %266 = vmatpush1.bf16.msra.mxu0 %v233
    %267 = vmatprep.subr.bf16.mxu0 %v236
    %268 = vmatpush1.bf16.msra.mxu0 %v235
    %269 = vmatprep.subr.bf16.mxu0 %v238
    %270 = vmatpush1.bf16.msra.mxu0 %v237
    %271 = vmatprep.subr.bf16.mxu0 0
    %272 = vmatpush1.bf16.msra.mxu0 0
    %273 = vmatprep.subr.bf16.mxu0 0
    %274 = vmatpush1.bf16.msra.mxu0 0
    %275 = vmatprep.subr.bf16.mxu0 0
    %276 = vmatpush1.bf16.msra.mxu0 0
    %277 = vmatprep.subr.bf16.mxu0 0
    %278 = vmatpush1.bf16.msra.mxu0 0
    %279 = vmatprep.subr.bf16.mxu0 0
    %280 = vmatpush1.bf16.msra.mxu0 0
    %281 = vmatprep.subr.bf16.mxu0 0
    %282 = vmatpush1.bf16.msra.mxu0 0
    %283 = vmatprep.subr.bf16.mxu0 0
    %284 = vmatpush1.bf16.msra.mxu0 0
    %285 = vmatprep.subr.bf16.mxu0 0
    %286 = vmatpush1.bf16.msra.mxu0 0
    %287 = vmatprep.mubr.bf16.mxu0 0
    %288 = vmatmul.mubr.bf16.gmra.mrb[0].mxu0 %v127
    %v289 = vpop.f32.mrb[0].mxu0
    %v290 = vadd.f32 0.0, %v289
    %v291 = vpop.f32.mrb[0].mxu0
    %v292 = vadd.f32 0.0, %v291
    %v293 = vpop.f32.mrb[0].mxu0
    %v294 = vadd.f32 0.0, %v293
    %v295 = vpop.f32.mrb[0].mxu0
    %v296 = vadd.f32 0.0, %v295
    %297 = vmatprep.mubr.bf16.mxu0 0
    %298 = vmatmul.mubr.bf16.gmra.mrb[0].mxu0 %v128
    %v299 = vpop.f32.mrb[0].mxu0
    %v300 = vadd.f32 0.0, %v299
    %v301 = vpop.f32.mrb[0].mxu0
    %v302 = vadd.f32 0.0, %v301
    %v303 = vpop.f32.mrb[0].mxu0
    %v304 = vadd.f32 0.0, %v303
    %v305 = vpop.f32.mrb[0].mxu0
    %v306 = vadd.f32 0.0, %v305
    %307 = vmatprep.mubr.bf16.mxu0 0
    %308 = vmatmul.mubr.bf16.gmra.mrb[0].mxu0 %v129
    %v309 = vpop.f32.mrb[0].mxu0
    %v310 = vadd.f32 0.0, %v309
    %v311 = vpop.f32.mrb[0].mxu0
    %v312 = vadd.f32 0.0, %v311
    %v313 = vpop.f32.mrb[0].mxu0
    %v314 = vadd.f32 0.0, %v313
    %v315 = vpop.f32.mrb[0].mxu0
    %v316 = vadd.f32 0.0, %v315
    %317 = vmatprep.mubr.bf16.mxu0 0
    %318 = vmatmul.mubr.bf16.gmra.mrb[0].mxu0 %v130
    %v319 = vpop.f32.mrb[0].mxu0
    %v320 = vadd.f32 0.0, %v319
    %v321 = vpop.f32.mrb[0].mxu0
    %v322 = vadd.f32 0.0, %v321
    %v323 = vpop.f32.mrb[0].mxu0
    %v324 = vadd.f32 0.0, %v323
    %v325 = vpop.f32.mrb[0].mxu0
    %v326 = vadd.f32 0.0, %v325
    %327 = vmatprep.mubr.bf16.mxu0 0
    %328 = vmatmul.mubr.bf16.gmra.mrb[0].mxu0 %v131
    %v329 = vpop.f32.mrb[0].mxu0
    %v330 = vadd.f32 0.0, %v329
    %v331 = vpop.f32.mrb[0].mxu0
    %v332 = vadd.f32 0.0, %v331
    %v333 = vpop.f32.mrb[0].mxu0
    %v334 = vadd.f32 0.0, %v333
    %v335 = vpop.f32.mrb[0].mxu0
    %v336 = vadd.f32 0.0, %v335
    %337 = vmatprep.mubr.bf16.mxu0 0
    %338 = vmatmul.mubr.bf16.gmra.mrb[0].mxu0 %v132
    %v339 = vpop.f32.mrb[0].mxu0
    %v340 = vadd.f32 0.0, %v339
    %v341 = vpop.f32.mrb[0].mxu0
    %v342 = vadd.f32 0.0, %v341
    %v343 = vpop.f32.mrb[0].mxu0
    %v344 = vadd.f32 0.0, %v343
    %v345 = vpop.f32.mrb[0].mxu0
    %v346 = vadd.f32 0.0, %v345
    %347 = vmatprep.mubr.bf16.mxu0 0
    %348 = vmatmul.mubr.bf16.gmra.mrb[0].mxu0 %v133
    %v349 = vpop.f32.mrb[0].mxu0
    %v350 = vadd.f32 0.0, %v349
    %v351 = vpop.f32.mrb[0].mxu0
    %v352 = vadd.f32 0.0, %v351
    %v353 = vpop.f32.mrb[0].mxu0
    %v354 = vadd.f32 0.0, %v353
    %v355 = vpop.f32.mrb[0].mxu0
    %v356 = vadd.f32 0.0, %v355
    %357 = vmatprep.mubr.bf16.mxu0 0
    %358 = vmatmul.mubr.bf16.gmra.mrb[0].mxu0 %v134
    %v359 = vpop.f32.mrb[0].mxu0
    %v360 = vadd.f32 0.0, %v359
    %v361 = vpop.f32.mrb[0].mxu0
    %v362 = vadd.f32 0.0, %v361
    %v363 = vpop.f32.mrb[0].mxu0
    %v364 = vadd.f32 0.0, %v363
    %v365 = vpop.f32.mrb[0].mxu0
    %v366 = vadd.f32 0.0, %v365
    %367 = vmatprep.mubr.bf16.mxu0 0
    %368 = vmatmul.mubr.bf16.gmra.mrb[0].mxu0 %v135
    %v369 = vpop.f32.mrb[0].mxu0
    %v370 = vadd.f32 0.0, %v369
    %v371 = vpop.f32.mrb[0].mxu0
    %v372 = vadd.f32 0.0, %v371
    %v373 = vpop.f32.mrb[0].mxu0
    %v374 = vadd.f32 0.0, %v373
    %v375 = vpop.f32.mrb[0].mxu0
    %v376 = vadd.f32 0.0, %v375
    %377 = vmatprep.mubr.bf16.mxu0 0
    %378 = vmatmul.mubr.bf16.gmra.mrb[0].mxu0 %v136
    %v379 = vpop.f32.mrb[0].mxu0
    %v380 = vadd.f32 0.0, %v379
    %v381 = vpop.f32.mrb[0].mxu0
    %v382 = vadd.f32 0.0, %v381
    %v383 = vpop.f32.mrb[0].mxu0
    %v384 = vadd.f32 0.0, %v383
    %v385 = vpop.f32.mrb[0].mxu0
    %v386 = vadd.f32 0.0, %v385
    %387 = vmatprep.mubr.bf16.mxu0 0
    %388 = vmatmul.mubr.bf16.gmra.mrb[0].mxu0 %v137
    %v389 = vpop.f32.mrb[0].mxu0
    %v390 = vadd.f32 0.0, %v389
    %v391 = vpop.f32.mrb[0].mxu0
    %v392 = vadd.f32 0.0, %v391
    %v393 = vpop.f32.mrb[0].mxu0
    %v394 = vadd.f32 0.0, %v393
    %v395 = vpop.f32.mrb[0].mxu0
    %v396 = vadd.f32 0.0, %v395
    %397 = vmatprep.mubr.bf16.mxu0 0
    %398 = vmatmul.mubr.bf16.gmra.mrb[0].mxu0 %v138
    %v399 = vpop.f32.mrb[0].mxu0
    %v400 = vadd.f32 0.0, %v399
    %v401 = vpop.f32.mrb[0].mxu0
    %v402 = vadd.f32 0.0, %v401
    %v403 = vpop.f32.mrb[0].mxu0
    %v404 = vadd.f32 0.0, %v403
    %v405 = vpop.f32.mrb[0].mxu0
    %v406 = vadd.f32 0.0, %v405
    %407 = vmatprep.mubr.bf16.mxu0 0
    %408 = vmatmul.mubr.bf16.gmra.mrb[0].mxu0 %v139
    %v409 = vpop.f32.mrb[0].mxu0
    %v410 = vadd.f32 0.0, %v409
    %v411 = vpop.f32.mrb[0].mxu0
    %v412 = vadd.f32 0.0, %v411
    %v413 = vpop.f32.mrb[0].mxu0
    %v414 = vadd.f32 0.0, %v413
    %v415 = vpop.f32.mrb[0].mxu0
    %v416 = vadd.f32 0.0, %v415
    %417 = vmatprep.mubr.bf16.mxu0 0
    %418 = vmatmul.mubr.bf16.gmra.mrb[0].mxu0 %v140
    %v419 = vpop.f32.mrb[0].mxu0
    %v420 = vadd.f32 0.0, %v419
    %v421 = vpop.f32.mrb[0].mxu0
    %v422 = vadd.f32 0.0, %v421
    %v423 = vpop.f32.mrb[0].mxu0
    %v424 = vadd.f32 0.0, %v423
    %v425 = vpop.f32.mrb[0].mxu0
    %v426 = vadd.f32 0.0, %v425
    %427 = vmatprep.mubr.bf16.mxu0 0
    %428 = vmatmul.mubr.bf16.gmra.mrb[0].mxu0 %v141
    %v429 = vpop.f32.mrb[0].mxu0
    %v430 = vadd.f32 0.0, %v429
    %v431 = vpop.f32.mrb[0].mxu0
    %v432 = vadd.f32 0.0, %v431
    %v433 = vpop.f32.mrb[0].mxu0
    %v434 = vadd.f32 0.0, %v433
    %v435 = vpop.f32.mrb[0].mxu0
    %v436 = vadd.f32 0.0, %v435
    %437 = vmatprep.mubr.bf16.mxu0 0
    %438 = vmatmul.mubr.bf16.gmra.mrb[0].mxu0 %v142
    %v439 = vpop.f32.mrb[0].mxu0
    %v440 = vadd.f32 0.0, %v439
    %v441 = vpop.f32.mrb[0].mxu0
    %v442 = vadd.f32 0.0, %v441
    %v443 = vpop.f32.mrb[0].mxu0
    %v444 = vadd.f32 0.0, %v443
    %v445 = vpop.f32.mrb[0].mxu0
    %v446 = vadd.f32 0.0, %v445
    %447 = vmatprep.mubr.bf16.mxu0 0
    %448 = vmatmul.mubr.bf16.gmra.mrb[0].mxu0 %v143
    %v449 = vpop.f32.mrb[0].mxu0
    %v450 = vadd.f32 0.0, %v449
    %v451 = vpop.f32.mrb[0].mxu0
    %v452 = vadd.f32 0.0, %v451
    %v453 = vpop.f32.mrb[0].mxu0
    %v454 = vadd.f32 0.0, %v453
    %v455 = vpop.f32.mrb[0].mxu0
    %v456 = vadd.f32 0.0, %v455
    %457 = vmatprep.mubr.bf16.mxu0 0
    %458 = vmatmul.mubr.bf16.gmra.mrb[0].mxu0 %v144
    %v459 = vpop.f32.mrb[0].mxu0
    %v460 = vadd.f32 0.0, %v459
    %v461 = vpop.f32.mrb[0].mxu0
    %v462 = vadd.f32 0.0, %v461
    %v463 = vpop.f32.mrb[0].mxu0
    %v464 = vadd.f32 0.0, %v463
    %v465 = vpop.f32.mrb[0].mxu0
    %v466 = vadd.f32 0.0, %v465
    %467 = vmatprep.mubr.bf16.mxu0 0
    %468 = vmatmul.mubr.bf16.gmra.mrb[0].mxu0 %v145
    %v469 = vpop.f32.mrb[0].mxu0
    %v470 = vadd.f32 0.0, %v469
    %v471 = vpop.f32.mrb[0].mxu0
    %v472 = vadd.f32 0.0, %v471
    %v473 = vpop.f32.mrb[0].mxu0
    %v474 = vadd.f32 0.0, %v473
    %v475 = vpop.f32.mrb[0].mxu0
    %v476 = vadd.f32 0.0, %v475
    %477 = vmatprep.mubr.bf16.mxu0 0
    %478 = vmatmul.mubr.bf16.gmra.mrb[0].mxu0 %v146
    %v479 = vpop.f32.mrb[0].mxu0
    %v480 = vadd.f32 0.0, %v479
    %v481 = vpop.f32.mrb[0].mxu0
    %v482 = vadd.f32 0.0, %v481
    %v483 = vpop.f32.mrb[0].mxu0
    %v484 = vadd.f32 0.0, %v483
    %v485 = vpop.f32.mrb[0].mxu0
    %v486 = vadd.f32 0.0, %v485
    %487 = vmatprep.mubr.bf16.mxu0 0
    %488 = vmatmul.mubr.bf16.gmra.mrb[0].mxu0 %v147
    %v489 = vpop.f32.mrb[0].mxu0
    %v490 = vadd.f32 0.0, %v489
    %v491 = vpop.f32.mrb[0].mxu0
    %v492 = vadd.f32 0.0, %v491
    %v493 = vpop.f32.mrb[0].mxu0
    %v494 = vadd.f32 0.0, %v493
    %v495 = vpop.f32.mrb[0].mxu0
    %v496 = vadd.f32 0.0, %v495
    %497 = vmatprep.mubr.bf16.mxu0 0
    %498 = vmatmul.mubr.bf16.gmra.mrb[0].mxu0 %v148
    %v499 = vpop.f32.mrb[0].mxu0
    %v500 = vadd.f32 0.0, %v499
    %v501 = vpop.f32.mrb[0].mxu0
    %v502 = vadd.f32 0.0, %v501
    %v503 = vpop.f32.mrb[0].mxu0
    %v504 = vadd.f32 0.0, %v503
    %v505 = vpop.f32.mrb[0].mxu0
    %v506 = vadd.f32 0.0, %v505
    %507 = vmatprep.mubr.bf16.mxu0 0
    %508 = vmatmul.mubr.bf16.gmra.mrb[0].mxu0 %v149
    %v509 = vpop.f32.mrb[0].mxu0
    %v510 = vadd.f32 0.0, %v509
    %v511 = vpop.f32.mrb[0].mxu0
    %v512 = vadd.f32 0.0, %v511
    %v513 = vpop.f32.mrb[0].mxu0
    %v514 = vadd.f32 0.0, %v513
    %v515 = vpop.f32.mrb[0].mxu0
    %v516 = vadd.f32 0.0, %v515
    %517 = vmatprep.mubr.bf16.mxu0 0
    %518 = vmatmul.mubr.bf16.gmra.mrb[0].mxu0 %v150
    %v519 = vpop.f32.mrb[0].mxu0
    %v520 = vadd.f32 0.0, %v519
    %v521 = vpop.f32.mrb[0].mxu0
    %v522 = vadd.f32 0.0, %v521
    %v523 = vpop.f32.mrb[0].mxu0
    %v524 = vadd.f32 0.0, %v523
    %v525 = vpop.f32.mrb[0].mxu0
    %v526 = vadd.f32 0.0, %v525
    %527 = vmatprep.mubr.bf16.mxu0 0
    %528 = vmatmul.mubr.bf16.gmra.mrb[0].mxu0 %v151
    %v529 = vpop.f32.mrb[0].mxu0
    %v530 = vadd.f32 0.0, %v529
    %v531 = vpop.f32.mrb[0].mxu0
    %v532 = vadd.f32 0.0, %v531
    %v533 = vpop.f32.mrb[0].mxu0
    %v534 = vadd.f32 0.0, %v533
    %v535 = vpop.f32.mrb[0].mxu0
    %v536 = vadd.f32 0.0, %v535
    %537 = vmatprep.mubr.bf16.mxu0 0
    %538 = vmatmul.mubr.bf16.gmra.mrb[0].mxu0 %v152
    %v539 = vpop.f32.mrb[0].mxu0
    %v540 = vadd.f32 0.0, %v539
    %v541 = vpop.f32.mrb[0].mxu0
    %v542 = vadd.f32 0.0, %v541
    %v543 = vpop.f32.mrb[0].mxu0
    %v544 = vadd.f32 0.0, %v543
    %v545 = vpop.f32.mrb[0].mxu0
    %v546 = vadd.f32 0.0, %v545
    %547 = vmatprep.mubr.bf16.mxu0 0
    %548 = vmatmul.mubr.bf16.gmra.mrb[0].mxu0 %v153
    %v549 = vpop.f32.mrb[0].mxu0
    %v550 = vadd.f32 0.0, %v549
    %v551 = vpop.f32.mrb[0].mxu0
    %v552 = vadd.f32 0.0, %v551
    %v553 = vpop.f32.mrb[0].mxu0
    %v554 = vadd.f32 0.0, %v553
    %v555 = vpop.f32.mrb[0].mxu0
    %v556 = vadd.f32 0.0, %v555
    %557 = vmatprep.mubr.bf16.mxu0 0
    %558 = vmatmul.mubr.bf16.gmra.mrb[0].mxu0 %v154
    %v559 = vpop.f32.mrb[0].mxu0
    %v560 = vadd.f32 0.0, %v559
    %v561 = vpop.f32.mrb[0].mxu0
    %v562 = vadd.f32 0.0, %v561
    %v563 = vpop.f32.mrb[0].mxu0
    %v564 = vadd.f32 0.0, %v563
    %v565 = vpop.f32.mrb[0].mxu0
    %v566 = vadd.f32 0.0, %v565
    %567 = vmatprep.mubr.bf16.mxu0 0
    %568 = vmatmul.mubr.bf16.gmra.mrb[0].mxu0 %v155
    %v569 = vpop.f32.mrb[0].mxu0
    %v570 = vadd.f32 0.0, %v569
    %v571 = vpop.f32.mrb[0].mxu0
    %v572 = vadd.f32 0.0, %v571
    %v573 = vpop.f32.mrb[0].mxu0
    %v574 = vadd.f32 0.0, %v573
    %v575 = vpop.f32.mrb[0].mxu0
    %v576 = vadd.f32 0.0, %v575
    %577 = vmatprep.mubr.bf16.mxu0 0
    %578 = vmatmul.mubr.bf16.gmra.mrb[0].mxu0 %v156
    %v579 = vpop.f32.mrb[0].mxu0
    %v580 = vadd.f32 0.0, %v579
    %v581 = vpop.f32.mrb[0].mxu0
    %v582 = vadd.f32 0.0, %v581
    %v583 = vpop.f32.mrb[0].mxu0
    %v584 = vadd.f32 0.0, %v583
    %v585 = vpop.f32.mrb[0].mxu0
    %v586 = vadd.f32 0.0, %v585
    %587 = vmatprep.mubr.bf16.mxu0 0
    %588 = vmatmul.mubr.bf16.gmra.mrb[0].mxu0 %v157
    %v589 = vpop.f32.mrb[0].mxu0
    %v590 = vadd.f32 0.0, %v589
    %v591 = vpop.f32.mrb[0].mxu0
    %v592 = vadd.f32 0.0, %v591
    %v593 = vpop.f32.mrb[0].mxu0
    %v594 = vadd.f32 0.0, %v593
    %v595 = vpop.f32.mrb[0].mxu0
    %v596 = vadd.f32 0.0, %v595
    %597 = vmatprep.mubr.bf16.mxu0 0
    %598 = vmatmul.mubr.bf16.gmra.mrb[0].mxu0 %v158
    %v599 = vpop.f32.mrb[0].mxu0
    %v600 = vadd.f32 0.0, %v599
    %v601 = vpop.f32.mrb[0].mxu0
    %v602 = vadd.f32 0.0, %v601
    %v603 = vpop.f32.mrb[0].mxu0
    %v604 = vadd.f32 0.0, %v603
    %v605 = vpop.f32.mrb[0].mxu0
    %v606 = vadd.f32 0.0, %v605
    %607 = vdwg.mxu0
    %v608 = vld [vmem:[%s2] sm:$0x3]
    %v609 = vpack.c.bf16 %v294, %v290
    %v610 = vpack.c.bf16 %v296, %v292
    %v611 = vpack.c.bf16 %v304, %v300
    %v612 = vpack.c.bf16 %v306, %v302
    %v613 = vpack.c.bf16 %v314, %v310
    %v614 = vpack.c.bf16 %v316, %v312
    %v615 = vpack.c.bf16 %v324, %v320
    %v616 = vpack.c.bf16 %v326, %v322
    %v617 = vpack.c.bf16 %v334, %v330
    %v618 = vpack.c.bf16 %v336, %v332
    %v619 = vpack.c.bf16 %v344, %v340
    %v620 = vpack.c.bf16 %v346, %v342
    %v621 = vpack.c.bf16 %v354, %v350
    %v622 = vpack.c.bf16 %v356, %v352
    %v623 = vpack.c.bf16 %v364, %v360
    %v624 = vpack.c.bf16 %v366, %v362
    %v625 = vpack.c.bf16 %v374, %v370
    %v626 = vpack.c.bf16 %v376, %v372
    %v627 = vpack.c.bf16 %v384, %v380
    %v628 = vpack.c.bf16 %v386, %v382
    %v629 = vpack.c.bf16 %v394, %v390
    %v630 = vpack.c.bf16 %v396, %v392
    %v631 = vpack.c.bf16 %v404, %v400
    %v632 = vpack.c.bf16 %v406, %v402
    %v633 = vpack.c.bf16 %v414, %v410
    %v634 = vpack.c.bf16 %v416, %v412
    %v635 = vpack.c.bf16 %v424, %v420
    %v636 = vpack.c.bf16 %v426, %v422
    %v637 = vpack.c.bf16 %v434, %v430
    %v638 = vpack.c.bf16 %v436, %v432
    %v639 = vpack.c.bf16 %v444, %v440
    %v640 = vpack.c.bf16 %v446, %v442
    %v641 = vpack.c.bf16 %v454, %v450
    %v642 = vpack.c.bf16 %v456, %v452
    %v643 = vpack.c.bf16 %v464, %v460
    %v644 = vpack.c.bf16 %v466, %v462
    %v645 = vpack.c.bf16 %v474, %v470
    %v646 = vpack.c.bf16 %v476, %v472
    %v647 = vpack.c.bf16 %v484, %v480
    %v648 = vpack.c.bf16 %v486, %v482
    %v649 = vpack.c.bf16 %v494, %v490
    %v650 = vpack.c.bf16 %v496, %v492
    %v651 = vpack.c.bf16 %v504, %v500
    %v652 = vpack.c.bf16 %v506, %v502
    %v653 = vpack.c.bf16 %v514, %v510
    %v654 = vpack.c.bf16 %v516, %v512
    %v655 = vpack.c.bf16 %v524, %v520
    %v656 = vpack.c.bf16 %v526, %v522
    %v657 = vpack.c.bf16 %v534, %v530
    %v658 = vpack.c.bf16 %v536, %v532
    %v659 = vpack.c.bf16 %v544, %v540
    %v660 = vpack.c.bf16 %v546, %v542
    %v661 = vpack.c.bf16 %v554, %v550
    %v662 = vpack.c.bf16 %v556, %v552
    %v663 = vpack.c.bf16 %v564, %v560
    %v664 = vpack.c.bf16 %v566, %v562
    %v665 = vpack.c.bf16 %v574, %v570
    %v666 = vpack.c.bf16 %v576, %v572
    %v667 = vpack.c.bf16 %v584, %v580
    %v668 = vpack.c.bf16 %v586, %v582
    %v669 = vpack.c.bf16 %v594, %v590
    %v670 = vpack.c.bf16 %v596, %v592
    %v671 = vpack.c.bf16 %v604, %v600
    %v672 = vpack.c.bf16 %v606, %v602
    %v675 = vunpack.c.l.s4 1966171168
    %v676 = vunpack.c.0.s8 %v675
    %v677 = vlaneseq
    %v678 = vshrl.u32 %v677, 7
    %v679 = vsub.s32 %v676, %v678
    %v680 = vrot.slane %v608, %v679
    %v681 = vcombine.high %v680, %v680
    %v683 = vunpack.c.l.s4 1966171168
    %v684 = vunpack.c.0.s8 %v683
    %v685 = vlaneseq
    %v686 = vshrl.u32 %v685, 7
    %v687 = vsub.s32 %v684, %v686
    %v688 = vrot.slane %v680, %v687
    %v690 = vunpack.c.l.s4 1966171168
    %v691 = vunpack.c.0.s8 %v690
    %v692 = vlaneseq
    %v693 = vshrl.u32 %v692, 7
    %v694 = vsub.s32 %v691, %v693
    %v695 = vrot.slane %v681, %v694
    %v697 = vpack.i.b16 %v688, %v688
    %v699 = vlaneseq
    %v700 = vshrl.u32 %v699, 7
    %v701 = vsub.s32 0, %v700
    %v702 = vrot.slane %v697, %v701
    %v704 = vpack.i.b16 %v695, %v695
    %v706 = vlaneseq
    %v707 = vshrl.u32 %v706, 7
    %v708 = vsub.s32 0, %v707
    %v709 = vrot.slane %v704, %v708
    %v710 = vadd.bf16 %v609, %v702
    %v711 = vadd.bf16 %v610, %v709
    %v712 = vadd.bf16 %v611, %v702
    %v713 = vadd.bf16 %v612, %v709
    %v714 = vadd.bf16 %v613, %v702
    %v715 = vadd.bf16 %v614, %v709
    %v716 = vadd.bf16 %v615, %v702
    %v717 = vadd.bf16 %v616, %v709
    %v718 = vadd.bf16 %v617, %v702
    %v719 = vadd.bf16 %v618, %v709
    %v720 = vadd.bf16 %v619, %v702
    %v721 = vadd.bf16 %v620, %v709
    %v722 = vadd.bf16 %v621, %v702
    %v723 = vadd.bf16 %v622, %v709
    %v724 = vadd.bf16 %v623, %v702
    %v725 = vadd.bf16 %v624, %v709
    %v726 = vadd.bf16 %v625, %v702
    %v727 = vadd.bf16 %v626, %v709
    %v728 = vadd.bf16 %v627, %v702
    %v729 = vadd.bf16 %v628, %v709
    %v730 = vadd.bf16 %v629, %v702
    %v731 = vadd.bf16 %v630, %v709
    %v732 = vadd.bf16 %v631, %v702
    %v733 = vadd.bf16 %v632, %v709
    %v734 = vadd.bf16 %v633, %v702
    %v735 = vadd.bf16 %v634, %v709
    %v736 = vadd.bf16 %v635, %v702
    %v737 = vadd.bf16 %v636, %v709
    %v738 = vadd.bf16 %v637, %v702
    %v739 = vadd.bf16 %v638, %v709
    %v740 = vadd.bf16 %v639, %v702
    %v741 = vadd.bf16 %v640, %v709
    %v742 = vadd.bf16 %v641, %v702
    %v743 = vadd.bf16 %v642, %v709
    %v744 = vadd.bf16 %v643, %v702
    %v745 = vadd.bf16 %v644, %v709
    %v746 = vadd.bf16 %v645, %v702
    %v747 = vadd.bf16 %v646, %v709
    %v748 = vadd.bf16 %v647, %v702
    %v749 = vadd.bf16 %v648, %v709
    %v750 = vadd.bf16 %v649, %v702
    %v751 = vadd.bf16 %v650, %v709
    %v752 = vadd.bf16 %v651, %v702
    %v753 = vadd.bf16 %v652, %v709
    %v754 = vadd.bf16 %v653, %v702
    %v755 = vadd.bf16 %v654, %v709
    %v756 = vadd.bf16 %v655, %v702
    %v757 = vadd.bf16 %v656, %v709
    %v758 = vadd.bf16 %v657, %v702
    %v759 = vadd.bf16 %v658, %v709
    %v760 = vadd.bf16 %v659, %v702
    %v761 = vadd.bf16 %v660, %v709
    %v762 = vadd.bf16 %v661, %v702
    %v763 = vadd.bf16 %v662, %v709
    %v764 = vadd.bf16 %v663, %v702
    %v765 = vadd.bf16 %v664, %v709
    %v766 = vadd.bf16 %v665, %v702
    %v767 = vadd.bf16 %v666, %v709
    %v768 = vadd.bf16 %v667, %v702
    %v769 = vadd.bf16 %v668, %v709
    %v770 = vadd.bf16 %v669, %v702
    %v771 = vadd.bf16 %v670, %v709
    %v772 = vadd.bf16 %v671, %v702
    %v773 = vadd.bf16 %v672, %v709
    %v774 = vmax.bf16 %v710, 0
    %v775 = vmax.bf16 %v711, 0
    %v776 = vmax.bf16 %v712, 0
    %v777 = vmax.bf16 %v713, 0
    %v778 = vmax.bf16 %v714, 0
    %v779 = vmax.bf16 %v715, 0
    %v780 = vmax.bf16 %v716, 0
    %v781 = vmax.bf16 %v717, 0
    %v782 = vmax.bf16 %v718, 0
    %v783 = vmax.bf16 %v719, 0
    %v784 = vmax.bf16 %v720, 0
    %v785 = vmax.bf16 %v721, 0
    %v786 = vmax.bf16 %v722, 0
    %v787 = vmax.bf16 %v723, 0
    %v788 = vmax.bf16 %v724, 0
    %v789 = vmax.bf16 %v725, 0
    %v790 = vmax.bf16 %v726, 0
    %v791 = vmax.bf16 %v727, 0
    %v792 = vmax.bf16 %v728, 0
    %v793 = vmax.bf16 %v729, 0
    %v794 = vmax.bf16 %v730, 0
    %v795 = vmax.bf16 %v731, 0
    %v796 = vmax.bf16 %v732, 0
    %v797 = vmax.bf16 %v733, 0
    %v798 = vmax.bf16 %v734, 0
    %v799 = vmax.bf16 %v735, 0
    %v800 = vmax.bf16 %v736, 0
    %v801 = vmax.bf16 %v737, 0
    %v802 = vmax.bf16 %v738, 0
    %v803 = vmax.bf16 %v739, 0
    %v804 = vmax.bf16 %v740, 0
    %v805 = vmax.bf16 %v741, 0
    %v806 = vmax.bf16 %v742, 0
    %v807 = vmax.bf16 %v743, 0
    %v808 = vmax.bf16 %v744, 0
    %v809 = vmax.bf16 %v745, 0
    %v810 = vmax.bf16 %v746, 0
    %v811 = vmax.bf16 %v747, 0
    %v812 = vmax.bf16 %v748, 0
    %v813 = vmax.bf16 %v749, 0
    %v814 = vmax.bf16 %v750, 0
    %v815 = vmax.bf16 %v751, 0
    %v816 = vmax.bf16 %v752, 0
    %v817 = vmax.bf16 %v753, 0
    %v818 = vmax.bf16 %v754, 0
    %v819 = vmax.bf16 %v755, 0
    %v820 = vmax.bf16 %v756, 0
    %v821 = vmax.bf16 %v757, 0
    %v822 = vmax.bf16 %v758, 0
    %v823 = vmax.bf16 %v759, 0
    %v824 = vmax.bf16 %v760, 0
    %v825 = vmax.bf16 %v761, 0
    %v826 = vmax.bf16 %v762, 0
    %v827 = vmax.bf16 %v763, 0
    %v828 = vmax.bf16 %v764, 0
    %v829 = vmax.bf16 %v765, 0
    %v830 = vmax.bf16 %v766, 0
    %v831 = vmax.bf16 %v767, 0
    %v832 = vmax.bf16 %v768, 0
    %v833 = vmax.bf16 %v769, 0
    %v834 = vmax.bf16 %v770, 0
    %v835 = vmax.bf16 %v771, 0
    %v836 = vmax.bf16 %v772, 0
    %v837 = vmax.bf16 %v773, 0
    %v838 = vld [vmem:[#allocation7] sm:$0xf]
    %v839 = vld [vmem:[#allocation7 + $0x4] sm:$0xf]
    %v840 = vld [vmem:[#allocation7 + $0x8] sm:$0xf]
    %v841 = vld [vmem:[#allocation7 + $0xc] sm:$0xf]
    %v842 = vld [vmem:[#allocation7 + $0x10] sm:$0xf]
    %v843 = vld [vmem:[#allocation7 + $0x14] sm:$0xf]
    %v844 = vld [vmem:[#allocation7 + $0x18] sm:$0xf]
    %v845 = vld [vmem:[#allocation7 + $0x1c] sm:$0xf]
    %v846 = vld [vmem:[#allocation7 + $0x20] sm:$0xf]
    %v847 = vld [vmem:[#allocation7 + $0x24] sm:$0xf]
    %v848 = vld [vmem:[#allocation7 + $0x28] sm:$0xf]
    %v849 = vld [vmem:[#allocation7 + $0x2c] sm:$0xf]
    %v850 = vld [vmem:[#allocation7 + $0x30] sm:$0xf]
    %v851 = vld [vmem:[#allocation7 + $0x34] sm:$0xf]
    %v852 = vld [vmem:[#allocation7 + $0x38] sm:$0xf]
    %v853 = vld [vmem:[#allocation7 + $0x3c] sm:$0xf]
    %v854 = vld [vmem:[#allocation7 + $0x40] sm:$0xf]
    %v855 = vld [vmem:[#allocation7 + $0x44] sm:$0xf]
    %v856 = vld [vmem:[#allocation7 + $0x48] sm:$0xf]
    %v857 = vld [vmem:[#allocation7 + $0x4c] sm:$0xf]
    %v858 = vld [vmem:[#allocation7 + $0x50] sm:$0xf]
    %v859 = vld [vmem:[#allocation7 + $0x54] sm:$0xf]
    %v860 = vld [vmem:[#allocation7 + $0x58] sm:$0xf]
    %v861 = vld [vmem:[#allocation7 + $0x5c] sm:$0xf]
    %v862 = vld [vmem:[#allocation7 + $0x60] sm:$0xf]
    %v863 = vld [vmem:[#allocation7 + $0x64] sm:$0xf]
    %v864 = vld [vmem:[#allocation7 + $0x68] sm:$0xf]
    %v865 = vld [vmem:[#allocation7 + $0x6c] sm:$0xf]
    %v866 = vld [vmem:[#allocation7 + $0x70] sm:$0xf]
    %v867 = vld [vmem:[#allocation7 + $0x74] sm:$0xf]
    %v868 = vld [vmem:[#allocation7 + $0x78] sm:$0xf]
    %v869 = vld [vmem:[#allocation7 + $0x7c] sm:$0xf]
    %v870 = vld [vmem:[%s4] sm:$0x1]
    %v872 = vlaneseq
    %v873 = vshrl.u32 %v872, 7
    %v874 = vsub.s32 0, %v873
    %v875 = vrot.slane %v870, %v874
    %v909 = vunpack.c.l.b16 %v838
    %v910 = vunpack.c.l.b16 %v839
    %v911 = vunpack.c.l.b16 %v840
    %v912 = vunpack.c.l.b16 %v841
    %v913 = vunpack.c.l.b16 %v842
    %v914 = vunpack.c.l.b16 %v843
    %v915 = vunpack.c.l.b16 %v844
    %v916 = vunpack.c.l.b16 %v845
    %v917 = vunpack.c.l.b16 %v846
    %v918 = vunpack.c.l.b16 %v847
    %v919 = vunpack.c.l.b16 %v848
    %v920 = vunpack.c.l.b16 %v849
    %v921 = vunpack.c.l.b16 %v850
    %v922 = vunpack.c.l.b16 %v851
    %v923 = vunpack.c.l.b16 %v852
    %v924 = vunpack.c.l.b16 %v853
    %v925 = vunpack.c.l.b16 %v854
    %v926 = vunpack.c.l.b16 %v855
    %v927 = vunpack.c.l.b16 %v856
    %v928 = vunpack.c.l.b16 %v857
    %v929 = vunpack.c.l.b16 %v858
    %v930 = vunpack.c.l.b16 %v859
    %v931 = vunpack.c.l.b16 %v860
    %v932 = vunpack.c.l.b16 %v861
    %v933 = vunpack.c.l.b16 %v862
    %v934 = vunpack.c.l.b16 %v863
    %v935 = vunpack.c.l.b16 %v864
    %v936 = vunpack.c.l.b16 %v865
    %v937 = vunpack.c.l.b16 %v866
    %v938 = vunpack.c.l.b16 %v867
    %v939 = vunpack.c.l.b16 %v868
    %v940 = vunpack.c.l.b16 %v869
    %v941 = vpack.c.b16 %v910, %v909
    %v942 = vpack.c.b16 %v912, %v911
    %v943 = vpack.c.b16 %v914, %v913
    %v944 = vpack.c.b16 %v916, %v915
    %v945 = vpack.c.b16 %v918, %v917
    %v946 = vpack.c.b16 %v920, %v919
    %v947 = vpack.c.b16 %v922, %v921
    %v948 = vpack.c.b16 %v924, %v923
    %v949 = vpack.c.b16 %v926, %v925
    %v950 = vpack.c.b16 %v928, %v927
    %v951 = vpack.c.b16 %v930, %v929
    %v952 = vpack.c.b16 %v932, %v931
    %v953 = vpack.c.b16 %v934, %v933
    %v954 = vpack.c.b16 %v936, %v935
    %v955 = vpack.c.b16 %v938, %v937
    %v956 = vpack.c.b16 %v940, %v939
    %973 = vmatprep.subr.bf16.mxu0 0
    %974 = vmatpush1.bf16.msra.mxu0 %v941
    %975 = vmatprep.subr.bf16.mxu0 0
    %976 = vmatpush1.bf16.msra.mxu0 %v942
    %977 = vmatprep.subr.bf16.mxu0 0
    %978 = vmatpush1.bf16.msra.mxu0 %v943
    %979 = vmatprep.subr.bf16.mxu0 0
    %980 = vmatpush1.bf16.msra.mxu0 %v944
    %981 = vmatprep.subr.bf16.mxu0 0
    %982 = vmatpush1.bf16.msra.mxu0 %v945
    %983 = vmatprep.subr.bf16.mxu0 0
    %984 = vmatpush1.bf16.msra.mxu0 %v946
    %985 = vmatprep.subr.bf16.mxu0 0
    %986 = vmatpush1.bf16.msra.mxu0 %v947
    %987 = vmatprep.subr.bf16.mxu0 0
    %988 = vmatpush1.bf16.msra.mxu0 %v948
    %989 = vmatprep.subr.bf16.mxu0 0
    %990 = vmatpush1.bf16.msra.mxu0 %v949
    %991 = vmatprep.subr.bf16.mxu0 0
    %992 = vmatpush1.bf16.msra.mxu0 %v950
    %993 = vmatprep.subr.bf16.mxu0 0
    %994 = vmatpush1.bf16.msra.mxu0 %v951
    %995 = vmatprep.subr.bf16.mxu0 0
    %996 = vmatpush1.bf16.msra.mxu0 %v952
    %997 = vmatprep.subr.bf16.mxu0 0
    %998 = vmatpush1.bf16.msra.mxu0 %v953
    %999 = vmatprep.subr.bf16.mxu0 0
    %1000 = vmatpush1.bf16.msra.mxu0 %v954
    %1001 = vmatprep.subr.bf16.mxu0 0
    %1002 = vmatpush1.bf16.msra.mxu0 %v955
    %1003 = vmatprep.subr.bf16.mxu0 0
    %1004 = vmatpush1.bf16.msra.mxu0 %v956
    %1005 = vmatprep.mubr.bf16.mxu0 %v775
    %1006 = vmatmul.mubr.bf16.gmra.mrb[0].mxu0 %v774
    %v1007 = vpop.f32.mrb[0].mxu0
    %v1008 = vadd.f32 %v875, %v1007
    %v1009 = vpop.f32.mrb[0].mxu0
    %v1010 = vpop.f32.mrb[0].mxu0
    %v1011 = vadd.f32 %v875, %v1010
    %v1012 = vpop.f32.mrb[0].mxu0
    %1013 = vmatprep.mubr.bf16.mxu0 %v777
    %1014 = vmatmul.mubr.bf16.gmra.mrb[0].mxu0 %v776
    %v1015 = vpop.f32.mrb[0].mxu0
    %v1016 = vadd.f32 %v875, %v1015
    %v1017 = vpop.f32.mrb[0].mxu0
    %v1018 = vpop.f32.mrb[0].mxu0
    %v1019 = vadd.f32 %v875, %v1018
    %v1020 = vpop.f32.mrb[0].mxu0
    %1021 = vmatprep.mubr.bf16.mxu0 %v779
    %1022 = vmatmul.mubr.bf16.gmra.mrb[0].mxu0 %v778
    %v1023 = vpop.f32.mrb[0].mxu0
    %v1024 = vadd.f32 %v875, %v1023
    %v1025 = vpop.f32.mrb[0].mxu0
    %v1026 = vpop.f32.mrb[0].mxu0
    %v1027 = vadd.f32 %v875, %v1026
    %v1028 = vpop.f32.mrb[0].mxu0
    %1029 = vmatprep.mubr.bf16.mxu0 %v781
    %1030 = vmatmul.mubr.bf16.gmra.mrb[0].mxu0 %v780
    %v1031 = vpop.f32.mrb[0].mxu0
    %v1032 = vadd.f32 %v875, %v1031
    %v1033 = vpop.f32.mrb[0].mxu0
    %v1034 = vpop.f32.mrb[0].mxu0
    %v1035 = vadd.f32 %v875, %v1034
    %v1036 = vpop.f32.mrb[0].mxu0
    %1037 = vmatprep.mubr.bf16.mxu0 %v783
    %1038 = vmatmul.mubr.bf16.gmra.mrb[0].mxu0 %v782
    %v1039 = vpop.f32.mrb[0].mxu0
    %v1040 = vadd.f32 %v875, %v1039
    %v1041 = vpop.f32.mrb[0].mxu0
    %v1042 = vpop.f32.mrb[0].mxu0
    %v1043 = vadd.f32 %v875, %v1042
    %v1044 = vpop.f32.mrb[0].mxu0
    %1045 = vmatprep.mubr.bf16.mxu0 %v785
    %1046 = vmatmul.mubr.bf16.gmra.mrb[0].mxu0 %v784
    %v1047 = vpop.f32.mrb[0].mxu0
    %v1048 = vadd.f32 %v875, %v1047
    %v1049 = vpop.f32.mrb[0].mxu0
    %v1050 = vpop.f32.mrb[0].mxu0
    %v1051 = vadd.f32 %v875, %v1050
    %v1052 = vpop.f32.mrb[0].mxu0
    %1053 = vmatprep.mubr.bf16.mxu0 %v787
    %1054 = vmatmul.mubr.bf16.gmra.mrb[0].mxu0 %v786
    %v1055 = vpop.f32.mrb[0].mxu0
    %v1056 = vadd.f32 %v875, %v1055
    %v1057 = vpop.f32.mrb[0].mxu0
    %v1058 = vpop.f32.mrb[0].mxu0
    %v1059 = vadd.f32 %v875, %v1058
    %v1060 = vpop.f32.mrb[0].mxu0
    %1061 = vmatprep.mubr.bf16.mxu0 %v789
    %1062 = vmatmul.mubr.bf16.gmra.mrb[0].mxu0 %v788
    %v1063 = vpop.f32.mrb[0].mxu0
    %v1064 = vadd.f32 %v875, %v1063
    %v1065 = vpop.f32.mrb[0].mxu0
    %v1066 = vpop.f32.mrb[0].mxu0
    %v1067 = vadd.f32 %v875, %v1066
    %v1068 = vpop.f32.mrb[0].mxu0
    %1069 = vmatprep.mubr.bf16.mxu0 %v791
    %1070 = vmatmul.mubr.bf16.gmra.mrb[0].mxu0 %v790
    %v1071 = vpop.f32.mrb[0].mxu0
    %v1072 = vadd.f32 %v875, %v1071
    %v1073 = vpop.f32.mrb[0].mxu0
    %v1074 = vpop.f32.mrb[0].mxu0
    %v1075 = vadd.f32 %v875, %v1074
    %v1076 = vpop.f32.mrb[0].mxu0
    %1077 = vmatprep.mubr.bf16.mxu0 %v793
    %1078 = vmatmul.mubr.bf16.gmra.mrb[0].mxu0 %v792
    %v1079 = vpop.f32.mrb[0].mxu0
    %v1080 = vadd.f32 %v875, %v1079
    %v1081 = vpop.f32.mrb[0].mxu0
    %v1082 = vpop.f32.mrb[0].mxu0
    %v1083 = vadd.f32 %v875, %v1082
    %v1084 = vpop.f32.mrb[0].mxu0
    %1085 = vmatprep.mubr.bf16.mxu0 %v795
    %1086 = vmatmul.mubr.bf16.gmra.mrb[0].mxu0 %v794
    %v1087 = vpop.f32.mrb[0].mxu0
    %v1088 = vadd.f32 %v875, %v1087
    %v1089 = vpop.f32.mrb[0].mxu0
    %v1090 = vpop.f32.mrb[0].mxu0
    %v1091 = vadd.f32 %v875, %v1090
    %v1092 = vpop.f32.mrb[0].mxu0
    %1093 = vmatprep.mubr.bf16.mxu0 %v797
    %1094 = vmatmul.mubr.bf16.gmra.mrb[0].mxu0 %v796
    %v1095 = vpop.f32.mrb[0].mxu0
    %v1096 = vadd.f32 %v875, %v1095
    %v1097 = vpop.f32.mrb[0].mxu0
    %v1098 = vpop.f32.mrb[0].mxu0
    %v1099 = vadd.f32 %v875, %v1098
    %v1100 = vpop.f32.mrb[0].mxu0
    %1101 = vmatprep.mubr.bf16.mxu0 %v799
    %1102 = vmatmul.mubr.bf16.gmra.mrb[0].mxu0 %v798
    %v1103 = vpop.f32.mrb[0].mxu0
    %v1104 = vadd.f32 %v875, %v1103
    %v1105 = vpop.f32.mrb[0].mxu0
    %v1106 = vpop.f32.mrb[0].mxu0
    %v1107 = vadd.f32 %v875, %v1106
    %v1108 = vpop.f32.mrb[0].mxu0
    %1109 = vmatprep.mubr.bf16.mxu0 %v801
    %1110 = vmatmul.mubr.bf16.gmra.mrb[0].mxu0 %v800
    %v1111 = vpop.f32.mrb[0].mxu0
    %v1112 = vadd.f32 %v875, %v1111
    %v1113 = vpop.f32.mrb[0].mxu0
    %v1114 = vpop.f32.mrb[0].mxu0
    %v1115 = vadd.f32 %v875, %v1114
    %v1116 = vpop.f32.mrb[0].mxu0
    %1117 = vmatprep.mubr.bf16.mxu0 %v803
    %1118 = vmatmul.mubr.bf16.gmra.mrb[0].mxu0 %v802
    %v1119 = vpop.f32.mrb[0].mxu0
    %v1120 = vadd.f32 %v875, %v1119
    %v1121 = vpop.f32.mrb[0].mxu0
    %v1122 = vpop.f32.mrb[0].mxu0
    %v1123 = vadd.f32 %v875, %v1122
    %v1124 = vpop.f32.mrb[0].mxu0
    %1125 = vmatprep.mubr.bf16.mxu0 %v805
    %1126 = vmatmul.mubr.bf16.gmra.mrb[0].mxu0 %v804
    %v1127 = vpop.f32.mrb[0].mxu0
    %v1128 = vadd.f32 %v875, %v1127
    %v1129 = vpop.f32.mrb[0].mxu0
    %v1130 = vpop.f32.mrb[0].mxu0
    %v1131 = vadd.f32 %v875, %v1130
    %v1132 = vpop.f32.mrb[0].mxu0
    %1133 = vmatprep.mubr.bf16.mxu0 %v807
    %1134 = vmatmul.mubr.bf16.gmra.mrb[0].mxu0 %v806
    %v1135 = vpop.f32.mrb[0].mxu0
    %v1136 = vadd.f32 %v875, %v1135
    %v1137 = vpop.f32.mrb[0].mxu0
    %v1138 = vpop.f32.mrb[0].mxu0
    %v1139 = vadd.f32 %v875, %v1138
    %v1140 = vpop.f32.mrb[0].mxu0
    %1141 = vmatprep.mubr.bf16.mxu0 %v809
    %1142 = vmatmul.mubr.bf16.gmra.mrb[0].mxu0 %v808
    %v1143 = vpop.f32.mrb[0].mxu0
    %v1144 = vadd.f32 %v875, %v1143
    %v1145 = vpop.f32.mrb[0].mxu0
    %v1146 = vpop.f32.mrb[0].mxu0
    %v1147 = vadd.f32 %v875, %v1146
    %v1148 = vpop.f32.mrb[0].mxu0
    %1149 = vmatprep.mubr.bf16.mxu0 %v811
    %1150 = vmatmul.mubr.bf16.gmra.mrb[0].mxu0 %v810
    %v1151 = vpop.f32.mrb[0].mxu0
    %v1152 = vadd.f32 %v875, %v1151
    %v1153 = vpop.f32.mrb[0].mxu0
    %v1154 = vpop.f32.mrb[0].mxu0
    %v1155 = vadd.f32 %v875, %v1154
    %v1156 = vpop.f32.mrb[0].mxu0
    %1157 = vmatprep.mubr.bf16.mxu0 %v813
    %1158 = vmatmul.mubr.bf16.gmra.mrb[0].mxu0 %v812
    %v1159 = vpop.f32.mrb[0].mxu0
    %v1160 = vadd.f32 %v875, %v1159
    %v1161 = vpop.f32.mrb[0].mxu0
    %v1162 = vpop.f32.mrb[0].mxu0
    %v1163 = vadd.f32 %v875, %v1162
    %v1164 = vpop.f32.mrb[0].mxu0
    %1165 = vmatprep.mubr.bf16.mxu0 %v815
    %1166 = vmatmul.mubr.bf16.gmra.mrb[0].mxu0 %v814
    %v1167 = vpop.f32.mrb[0].mxu0
    %v1168 = vadd.f32 %v875, %v1167
    %v1169 = vpop.f32.mrb[0].mxu0
    %v1170 = vpop.f32.mrb[0].mxu0
    %v1171 = vadd.f32 %v875, %v1170
    %v1172 = vpop.f32.mrb[0].mxu0
    %1173 = vmatprep.mubr.bf16.mxu0 %v817
    %1174 = vmatmul.mubr.bf16.gmra.mrb[0].mxu0 %v816
    %v1175 = vpop.f32.mrb[0].mxu0
    %v1176 = vadd.f32 %v875, %v1175
    %v1177 = vpop.f32.mrb[0].mxu0
    %v1178 = vpop.f32.mrb[0].mxu0
    %v1179 = vadd.f32 %v875, %v1178
    %v1180 = vpop.f32.mrb[0].mxu0
    %1181 = vmatprep.mubr.bf16.mxu0 %v819
    %1182 = vmatmul.mubr.bf16.gmra.mrb[0].mxu0 %v818
    %v1183 = vpop.f32.mrb[0].mxu0
    %v1184 = vadd.f32 %v875, %v1183
    %v1185 = vpop.f32.mrb[0].mxu0
    %v1186 = vpop.f32.mrb[0].mxu0
    %v1187 = vadd.f32 %v875, %v1186
    %v1188 = vpop.f32.mrb[0].mxu0
    %1189 = vmatprep.mubr.bf16.mxu0 %v821
    %1190 = vmatmul.mubr.bf16.gmra.mrb[0].mxu0 %v820
    %v1191 = vpop.f32.mrb[0].mxu0
    %v1192 = vadd.f32 %v875, %v1191
    %v1193 = vpop.f32.mrb[0].mxu0
    %v1194 = vpop.f32.mrb[0].mxu0
    %v1195 = vadd.f32 %v875, %v1194
    %v1196 = vpop.f32.mrb[0].mxu0
    %1197 = vmatprep.mubr.bf16.mxu0 %v823
    %1198 = vmatmul.mubr.bf16.gmra.mrb[0].mxu0 %v822
    %v1199 = vpop.f32.mrb[0].mxu0
    %v1200 = vadd.f32 %v875, %v1199
    %v1201 = vpop.f32.mrb[0].mxu0
    %v1202 = vpop.f32.mrb[0].mxu0
    %v1203 = vadd.f32 %v875, %v1202
    %v1204 = vpop.f32.mrb[0].mxu0
    %1205 = vmatprep.mubr.bf16.mxu0 %v825
    %1206 = vmatmul.mubr.bf16.gmra.mrb[0].mxu0 %v824
    %v1207 = vpop.f32.mrb[0].mxu0
    %v1208 = vadd.f32 %v875, %v1207
    %v1209 = vpop.f32.mrb[0].mxu0
    %v1210 = vpop.f32.mrb[0].mxu0
    %v1211 = vadd.f32 %v875, %v1210
    %v1212 = vpop.f32.mrb[0].mxu0
    %1213 = vmatprep.mubr.bf16.mxu0 %v827
    %1214 = vmatmul.mubr.bf16.gmra.mrb[0].mxu0 %v826
    %v1215 = vpop.f32.mrb[0].mxu0
    %v1216 = vadd.f32 %v875, %v1215
    %v1217 = vpop.f32.mrb[0].mxu0
    %v1218 = vpop.f32.mrb[0].mxu0
    %v1219 = vadd.f32 %v875, %v1218
    %v1220 = vpop.f32.mrb[0].mxu0
    %1221 = vmatprep.mubr.bf16.mxu0 %v829
    %1222 = vmatmul.mubr.bf16.gmra.mrb[0].mxu0 %v828
    %v1223 = vpop.f32.mrb[0].mxu0
    %v1224 = vadd.f32 %v875, %v1223
    %v1225 = vpop.f32.mrb[0].mxu0
    %v1226 = vpop.f32.mrb[0].mxu0
    %v1227 = vadd.f32 %v875, %v1226
    %v1228 = vpop.f32.mrb[0].mxu0
    %1229 = vmatprep.mubr.bf16.mxu0 %v831
    %1230 = vmatmul.mubr.bf16.gmra.mrb[0].mxu0 %v830
    %v1231 = vpop.f32.mrb[0].mxu0
    %v1232 = vadd.f32 %v875, %v1231
    %v1233 = vpop.f32.mrb[0].mxu0
    %v1234 = vpop.f32.mrb[0].mxu0
    %v1235 = vadd.f32 %v875, %v1234
    %v1236 = vpop.f32.mrb[0].mxu0
    %1237 = vmatprep.mubr.bf16.mxu0 %v833
    %1238 = vmatmul.mubr.bf16.gmra.mrb[0].mxu0 %v832
    %v1239 = vpop.f32.mrb[0].mxu0
    %v1240 = vadd.f32 %v875, %v1239
    %v1241 = vpop.f32.mrb[0].mxu0
    %v1242 = vpop.f32.mrb[0].mxu0
    %v1243 = vadd.f32 %v875, %v1242
    %v1244 = vpop.f32.mrb[0].mxu0
    %1245 = vmatprep.mubr.bf16.mxu0 %v835
    %1246 = vmatmul.mubr.bf16.gmra.mrb[0].mxu0 %v834
    %v1247 = vpop.f32.mrb[0].mxu0
    %v1248 = vadd.f32 %v875, %v1247
    %v1249 = vpop.f32.mrb[0].mxu0
    %v1250 = vpop.f32.mrb[0].mxu0
    %v1251 = vadd.f32 %v875, %v1250
    %v1252 = vpop.f32.mrb[0].mxu0
    %1253 = vmatprep.mubr.bf16.mxu0 %v837
    %1254 = vmatmul.mubr.bf16.gmra.mrb[0].mxu0 %v836
    %v1255 = vpop.f32.mrb[0].mxu0
    %v1256 = vadd.f32 %v875, %v1255
    %v1257 = vpop.f32.mrb[0].mxu0
    %v1258 = vpop.f32.mrb[0].mxu0
    %v1259 = vadd.f32 %v875, %v1258
    %v1260 = vpop.f32.mrb[0].mxu0
    %1261 = vdwg.mxu0
    %1262 = vst [vmem:[#allocation8] sm:$0xff] %v1008
    %1263 = vst [vmem:[#allocation8 + $0x8] sm:$0xff] %v1011
    %1264 = vst [vmem:[#allocation8 + $0x10] sm:$0xff] %v1016
    %1265 = vst [vmem:[#allocation8 + $0x18] sm:$0xff] %v1019
    %1266 = vst [vmem:[#allocation8 + $0x20] sm:$0xff] %v1024
    %1267 = vst [vmem:[#allocation8 + $0x28] sm:$0xff] %v1027
    %1268 = vst [vmem:[#allocation8 + $0x30] sm:$0xff] %v1032
    %1269 = vst [vmem:[#allocation8 + $0x38] sm:$0xff] %v1035
    %1270 = vst [vmem:[#allocation8 + $0x40] sm:$0xff] %v1040
    %1271 = vst [vmem:[#allocation8 + $0x48] sm:$0xff] %v1043
    %1272 = vst [vmem:[#allocation8 + $0x50] sm:$0xff] %v1048
    %1273 = vst [vmem:[#allocation8 + $0x58] sm:$0xff] %v1051
    %1274 = vst [vmem:[#allocation8 + $0x60] sm:$0xff] %v1056
    %1275 = vst [vmem:[#allocation8 + $0x68] sm:$0xff] %v1059
    %1276 = vst [vmem:[#allocation8 + $0x70] sm:$0xff] %v1064
    %1277 = vst [vmem:[#allocation8 + $0x78] sm:$0xff] %v1067
    %1278 = vst [vmem:[#allocation8 + $0x80] sm:$0xff] %v1072
    %1279 = vst [vmem:[#allocation8 + $0x88] sm:$0xff] %v1075
    %1280 = vst [vmem:[#allocation8 + $0x90] sm:$0xff] %v1080
    %1281 = vst [vmem:[#allocation8 + $0x98] sm:$0xff] %v1083
    %1282 = vst [vmem:[#allocation8 + $0xa0] sm:$0xff] %v1088
    %1283 = vst [vmem:[#allocation8 + $0xa8] sm:$0xff] %v1091
    %1284 = vst [vmem:[#allocation8 + $0xb0] sm:$0xff] %v1096
    %1285 = vst [vmem:[#allocation8 + $0xb8] sm:$0xff] %v1099
    %1286 = vst [vmem:[#allocation8 + $0xc0] sm:$0xff] %v1104
    %1287 = vst [vmem:[#allocation8 + $0xc8] sm:$0xff] %v1107
    %1288 = vst [vmem:[#allocation8 + $0xd0] sm:$0xff] %v1112
    %1289 = vst [vmem:[#allocation8 + $0xd8] sm:$0xff] %v1115
    %1290 = vst [vmem:[#allocation8 + $0xe0] sm:$0xff] %v1120
    %1291 = vst [vmem:[#allocation8 + $0xe8] sm:$0xff] %v1123
    %1292 = vst [vmem:[#allocation8 + $0xf0] sm:$0xff] %v1128
    %1293 = vst [vmem:[#allocation8 + $0xf8] sm:$0xff] %v1131
    %1294 = vst [vmem:[#allocation8 + $0x100] sm:$0xff] %v1136
    %1295 = vst [vmem:[#allocation8 + $0x108] sm:$0xff] %v1139
    %1296 = vst [vmem:[#allocation8 + $0x110] sm:$0xff] %v1144
    %1297 = vst [vmem:[#allocation8 + $0x118] sm:$0xff] %v1147
    %1298 = vst [vmem:[#allocation8 + $0x120] sm:$0xff] %v1152
    %1299 = vst [vmem:[#allocation8 + $0x128] sm:$0xff] %v1155
    %1300 = vst [vmem:[#allocation8 + $0x130] sm:$0xff] %v1160
    %1301 = vst [vmem:[#allocation8 + $0x138] sm:$0xff] %v1163
    %1302 = vst [vmem:[#allocation8 + $0x140] sm:$0xff] %v1168
    %1303 = vst [vmem:[#allocation8 + $0x148] sm:$0xff] %v1171
    %1304 = vst [vmem:[#allocation8 + $0x150] sm:$0xff] %v1176
    %1305 = vst [vmem:[#allocation8 + $0x158] sm:$0xff] %v1179
    %1306 = vst [vmem:[#allocation8 + $0x160] sm:$0xff] %v1184
    %1307 = vst [vmem:[#allocation8 + $0x168] sm:$0xff] %v1187
    %1308 = vst [vmem:[#allocation8 + $0x170] sm:$0xff] %v1192
    %1309 = vst [vmem:[#allocation8 + $0x178] sm:$0xff] %v1195
    %1310 = vst [vmem:[#allocation8 + $0x180] sm:$0xff] %v1200
    %1311 = vst [vmem:[#allocation8 + $0x188] sm:$0xff] %v1203
    %1312 = vst [vmem:[#allocation8 + $0x190] sm:$0xff] %v1208
    %1313 = vst [vmem:[#allocation8 + $0x198] sm:$0xff] %v1211
    %1314 = vst [vmem:[#allocation8 + $0x1a0] sm:$0xff] %v1216
    %1315 = vst [vmem:[#allocation8 + $0x1a8] sm:$0xff] %v1219
    %1316 = vst [vmem:[#allocation8 + $0x1b0] sm:$0xff] %v1224
    %1317 = vst [vmem:[#allocation8 + $0x1b8] sm:$0xff] %v1227
    %1318 = vst [vmem:[#allocation8 + $0x1c0] sm:$0xff] %v1232
    %1319 = vst [vmem:[#allocation8 + $0x1c8] sm:$0xff] %v1235
    %1320 = vst [vmem:[#allocation8 + $0x1d0] sm:$0xff] %v1240
    %1321 = vst [vmem:[#allocation8 + $0x1d8] sm:$0xff] %v1243
    %1322 = vst [vmem:[#allocation8 + $0x1e0] sm:$0xff] %v1248
    %1323 = vst [vmem:[#allocation8 + $0x1e8] sm:$0xff] %v1251
    %1324 = vst [vmem:[#allocation8 + $0x1f0] sm:$0xff] %v1256
    %1325 = vst [vmem:[#allocation8 + $0x1f8] sm:$0xff] %v1259
    // Predicated region
    $region34: #{tpu_custom_call.1} parent=1 // pred_check
      _
    $region35: #{tpu_custom_call.1} parent=1 // pred_check_branch
      %1327 = sbr.rel (0) target = $region37
    $region36: #{tpu_custom_call.1} parent=1 // pred_region
      %s1329 = ssub.s32 8192, 8192
      %1330 = vsyncadd [#allocation4], %s1329
      %s1331 = sshll.u32 [#allocation8], 4
      %s1332 = int_to_ptr.vmem [resolvable:$true] %s1331
      %1337 = dma.vmem_to_hbm [thread:$0]  %s1332, 8192, %s5, [#allocation4], 128, 128, 8
    $region37: #{tpu_custom_call.1} parent=1 // pred_fallthru
      _
    // Predicated region
    $region38: #{tpu_custom_call.1} parent=1 // pred_check
      _
    $region39: #{tpu_custom_call.1} parent=1 // pred_check_branch
      %1339 = sbr.rel (0) target = $region41
    $region40: #{tpu_custom_call.1} parent=1 // pred_region
      %1340 = dma.done [#allocation4], 8192
    $region41: #{tpu_custom_call.1} parent=1 // pred_fallthru
      _
    %1341 = vsyncpa [#allocation3], 1
    %1342 = vsyncpa [#allocation6], 1
    %1343 = vsyncpa [#allocation4], 1

// kernel: tpu_custom_call.1
$region0: #{tpu_custom_call.1}
  #allocation0 [shape = 'u32[]', space=smem, size = 0x4, offset = 0x4, fixed_abs, tag = 'smem constant byte address 0x4 - core index']
  #allocation1 [shape = 'u32[144,128]{1,0:T(1,128)}', space=vmem, size = 0x12000, scoped, tag = 'internal scratch']
  %s0 = inlined_call_operand.hbm [shape: f32[512,128], index: 0, kind: input, shape index: {}]
  %s1 = inlined_call_operand.hbm [shape: bf16[128,256], index: 1, kind: input, shape index: {}]
  %s2 = inlined_call_operand.vmem [shape: bf16[1,256], index: 2, kind: input, shape index: {}]
  %s3 = inlined_call_operand.hbm [shape: bf16[256,128], index: 3, kind: input, shape index: {}]
  %s4 = inlined_call_operand.vmem [shape: f32[1,128], index: 4, kind: input, shape index: {}]
  %s5 = inlined_call_operand.hbm [shape: f32[512,128], index: 5, kind: output, shape index: {}]
  %s6 = sld [smem:[#allocation0]]
  $region42: #{tpu_custom_call.1} parent=0
    _
  %s8 = ssub.s32 1, %s6
  %s9 = scalar_select 0, %s8, %s6
  $region1: #{tpu_custom_call.1} parent=0
    #allocation2 [shape = 'u8[262144]{0}', space=vmem, size = 0x40000, scoped, tag = 'input window, operand 0, single buffered']
    #allocation3 [shape = 's32[1]{0}', space=sflag, size = 0x4, scoped, tag = 'scoped memory for tpu_custom_call.1']
    #allocation4 [shape = 's32[1]{0}', space=sflag, size = 0x4, scoped, tag = 'scoped memory for tpu_custom_call.1']
    #allocation5 [shape = 'u8[65536]{0}', space=vmem, size = 0x10000, scoped, tag = 'input window, operand 1, single buffered']
    #allocation6 [shape = 's32[1]{0}', space=sflag, size = 0x4, scoped, tag = 'scoped memory for tpu_custom_call.1']
    #allocation7 [shape = 'u8[65536]{0}', space=vmem, size = 0x10000, scoped, tag = 'input window, operand 3, single buffered']
    #allocation8 [shape = 'u8[262144]{0}', space=vmem, size = 0x40000, scoped, tag = 'output window, operand 0, single buffered']
    %10 = vsyncpa [#allocation3], 0
    %11 = vsyncpa [#allocation6], 0
    %12 = vsyncpa [#allocation4], 0
    // Predicated region
    $region2: #{tpu_custom_call.1} parent=1 // pred_check
      _
    $region3: #{tpu_custom_call.1} parent=1 // pred_check_branch
      %14 = sbr.rel (0) target = $region5
    $region4: #{tpu_custom_call.1} parent=1 // pred_region
      %s16 = ssub.s32 8192, 8192
      %17 = vsyncadd [#allocation3], %s16
      %s18 = sshll.u32 [#allocation2], 4
      %s19 = int_to_ptr.vmem [resolvable:$true] %s18
      %24 = dma.hbm_to_vmem [thread:$0]  %s0, 8192, %s19, [#allocation3], 128, 128, 8
    $region5: #{tpu_custom_call.1} parent=1 // pred_fallthru
      _
    // Predicated region
    $region6: #{tpu_custom_call.1} parent=1 // pred_check
      _
    $region7: #{tpu_custom_call.1} parent=1 // pred_check_branch
      %26 = sbr.rel (0) target = $region9
    $region8: #{tpu_custom_call.1} parent=1 // pred_region
      %s28 = ssub.s32 2048, 2048
      %29 = vsyncadd [#allocation6], %s28
      %s30 = sshll.u32 [#allocation5], 4
      %s31 = int_to_ptr.vmem [resolvable:$true] %s30
      %36 = dma.hbm_to_vmem [thread:$0]  %s1, 2048, %s31, [#allocation6], 128, 128, 8
    $region9: #{tpu_custom_call.1} parent=1 // pred_fallthru
      _
    // Predicated region
    $region10: #{tpu_custom_call.1} parent=1 // pred_check
      _
    $region11: #{tpu_custom_call.1} parent=1 // pred_check_branch
      %38 = sbr.rel (0) target = $region13
    $region12: #{tpu_custom_call.1} parent=1 // pred_region
      _
    $region13: #{tpu_custom_call.1} parent=1 // pred_fallthru
      _
    // Predicated region
    $region14: #{tpu_custom_call.1} parent=1 // pred_check
      _
    $region15: #{tpu_custom_call.1} parent=1 // pred_check_branch
      %40 = sbr.rel (0) target = $region17
    $region16: #{tpu_custom_call.1} parent=1 // pred_region
      %s42 = ssub.s32 2048, 2048
      %43 = vsyncadd [#allocation6], %s42
      %s44 = sshll.u32 [#allocation7], 4
      %s45 = int_to_ptr.vmem [resolvable:$true] %s44
      %50 = dma.hbm_to_vmem [thread:$0]  %s3, 2048, %s45, [#allocation6], 64, 64, 4
    $region17: #{tpu_custom_call.1} parent=1 // pred_fallthru
      _
    // Predicated region
    $region18: #{tpu_custom_call.1} parent=1 // pred_check
      _
    $region19: #{tpu_custom_call.1} parent=1 // pred_check_branch
      %52 = sbr.rel (0) target = $region21
    $region20: #{tpu_custom_call.1} parent=1 // pred_region
      _
    $region21: #{tpu_custom_call.1} parent=1 // pred_fallthru
      _
    // Predicated region
    $region22: #{tpu_custom_call.1} parent=1 // pred_check
      _
    $region23: #{tpu_custom_call.1} parent=1 // pred_check_branch
      %54 = sbr.rel (0) target = $region25
    $region24: #{tpu_custom_call.1} parent=1 // pred_region
      %55 = dma.done [#allocation3], 8192
    $region25: #{tpu_custom_call.1} parent=1 // pred_fallthru
      _
    // Predicated region
    $region26: #{tpu_custom_call.1} parent=1 // pred_check
      _
    $region27: #{tpu_custom_call.1} parent=1 // pred_check_branch
      %57 = sbr.rel (0) target = $region29
    $region28: #{tpu_custom_call.1} parent=1 // pred_region
      %58 = dma.done [#allocation6], 2048
    $region29: #{tpu_custom_call.1} parent=1 // pred_fallthru
      _
    // Predicated region
    $region30: #{tpu_custom_call.1} parent=1 // pred_check
      _
    $region31: #{tpu_custom_call.1} parent=1 // pred_check_branch
      %60 = sbr.rel (0) target = $region33
    $region32: #{tpu_custom_call.1} parent=1 // pred_region
      %61 = dma.done [#allocation6], 2048
    $region33: #{tpu_custom_call.1} parent=1 // pred_fallthru
      _
    %v63 = vld [vmem:[#allocation2] sm:$0xff]
    %v64 = vld [vmem:[#allocation2 + $0x8] sm:$0xff]
    %v65 = vld [vmem:[#allocation2 + $0x10] sm:$0xff]
    %v66 = vld [vmem:[#allocation2 + $0x18] sm:$0xff]
    %v67 = vld [vmem:[#allocation2 + $0x20] sm:$0xff]
    %v68 = vld [vmem:[#allocation2 + $0x28] sm:$0xff]
    %v69 = vld [vmem:[#allocation2 + $0x30] sm:$0xff]
    %v70 = vld [vmem:[#allocation2 + $0x38] sm:$0xff]
    %v71 = vld [vmem:[#allocation2 + $0x40] sm:$0xff]
    %v72 = vld [vmem:[#allocation2 + $0x48] sm:$0xff]
    %v73 = vld [vmem:[#allocation2 + $0x50] sm:$0xff]
    %v74 = vld [vmem:[#allocation2 + $0x58] sm:$0xff]
    %v75 = vld [vmem:[#allocation2 + $0x60] sm:$0xff]
    %v76 = vld [vmem:[#allocation2 + $0x68] sm:$0xff]
    %v77 = vld [vmem:[#allocation2 + $0x70] sm:$0xff]
    %v78 = vld [vmem:[#allocation2 + $0x78] sm:$0xff]
    %v79 = vld [vmem:[#allocation2 + $0x80] sm:$0xff]
    %v80 = vld [vmem:[#allocation2 + $0x88] sm:$0xff]
    %v81 = vld [vmem:[#allocation2 + $0x90] sm:$0xff]
    %v82 = vld [vmem:[#allocation2 + $0x98] sm:$0xff]
    %v83 = vld [vmem:[#allocation2 + $0xa0] sm:$0xff]
    %v84 = vld [vmem:[#allocation2 + $0xa8] sm:$0xff]
    %v85 = vld [vmem:[#allocation2 + $0xb0] sm:$0xff]
    %v86 = vld [vmem:[#allocation2 + $0xb8] sm:$0xff]
    %v87 = vld [vmem:[#allocation2 + $0xc0] sm:$0xff]
    %v88 = vld [vmem:[#allocation2 + $0xc8] sm:$0xff]
    %v89 = vld [vmem:[#allocation2 + $0xd0] sm:$0xff]
    %v90 = vld [vmem:[#allocation2 + $0xd8] sm:$0xff]
    %v91 = vld [vmem:[#allocation2 + $0xe0] sm:$0xff]
    %v92 = vld [vmem:[#allocation2 + $0xe8] sm:$0xff]
    %v93 = vld [vmem:[#allocation2 + $0xf0] sm:$0xff]
    %v94 = vld [vmem:[#allocation2 + $0xf8] sm:$0xff]
    %v95 = vld [vmem:[#allocation2 + $0x100] sm:$0xff]
    %v96 = vld [vmem:[#allocation2 + $0x108] sm:$0xff]
    %v97 = vld [vmem:[#allocation2 + $0x110] sm:$0xff]
    %v98 = vld [vmem:[#allocation2 + $0x118] sm:$0xff]
    %v99 = vld [vmem:[#allocation2 + $0x120] sm:$0xff]
    %v100 = vld [vmem:[#allocation2 + $0x128] sm:$0xff]
    %v101 = vld [vmem:[#allocation2 + $0x130] sm:$0xff]
    %v102 = vld [vmem:[#allocation2 + $0x138] sm:$0xff]
    %v103 = vld [vmem:[#allocation2 + $0x140] sm:$0xff]
    %v104 = vld [vmem:[#allocation2 + $0x148] sm:$0xff]
    %v105 = vld [vmem:[#allocation2 + $0x150] sm:$0xff]
    %v106 = vld [vmem:[#allocation2 + $0x158] sm:$0xff]
    %v107 = vld [vmem:[#allocation2 + $0x160] sm:$0xff]
    %v108 = vld [vmem:[#allocation2 + $0x168] sm:$0xff]
    %v109 = vld [vmem:[#allocation2 + $0x170] sm:$0xff]
    %v110 = vld [vmem:[#allocation2 + $0x178] sm:$0xff]
    %v111 = vld [vmem:[#allocation2 + $0x180] sm:$0xff]
    %v112 = vld [vmem:[#allocation2 + $0x188] sm:$0xff]
    %v113 = vld [vmem:[#allocation2 + $0x190] sm:$0xff]
    %v114 = vld [vmem:[#allocation2 + $0x198] sm:$0xff]
    %v115 = vld [vmem:[#allocation2 + $0x1a0] sm:$0xff]
    %v116 = vld [vmem:[#allocation2 + $0x1a8] sm:$0xff]
    %v117 = vld [vmem:[#allocation2 + $0x1b0] sm:$0xff]
    %v118 = vld [vmem:[#allocation2 + $0x1b8] sm:$0xff]
    %v119 = vld [vmem:[#allocation2 + $0x1c0] sm:$0xff]
    %v120 = vld [vmem:[#allocation2 + $0x1c8] sm:$0xff]
    %v121 = vld [vmem:[#allocation2 + $0x1d0] sm:$0xff]
    %v122 = vld [vmem:[#allocation2 + $0x1d8] sm:$0xff]
    %v123 = vld [vmem:[#allocation2 + $0x1e0] sm:$0xff]
    %v124 = vld [vmem:[#allocation2 + $0x1e8] sm:$0xff]
    %v125 = vld [vmem:[#allocation2 + $0x1f0] sm:$0xff]
    %v126 = vld [vmem:[#allocation2 + $0x1f8] sm:$0xff]
    %v127 = vpack.c.bf16 %v64, %v63
    %v128 = vpack.c.bf16 %v66, %v65
    %v129 = vpack.c.bf16 %v68, %v67
    %v130 = vpack.c.bf16 %v70, %v69
    %v131 = vpack.c.bf16 %v72, %v71
    %v132 = vpack.c.bf16 %v74, %v73
    %v133 = vpack.c.bf16 %v76, %v75
    %v134 = vpack.c.bf16 %v78, %v77
    %v135 = vpack.c.bf16 %v80, %v79
    %v136 = vpack.c.bf16 %v82, %v81
    %v137 = vpack.c.bf16 %v84, %v83
    %v138 = vpack.c.bf16 %v86, %v85
    %v139 = vpack.c.bf16 %v88, %v87
    %v140 = vpack.c.bf16 %v90, %v89
    %v141 = vpack.c.bf16 %v92, %v91
    %v142 = vpack.c.bf16 %v94, %v93
    %v143 = vpack.c.bf16 %v96, %v95
    %v144 = vpack.c.bf16 %v98, %v97
    %v145 = vpack.c.bf16 %v100, %v99
    %v146 = vpack.c.bf16 %v102, %v101
    %v147 = vpack.c.bf16 %v104, %v103
    %v148 = vpack.c.bf16 %v106, %v105
    %v149 = vpack.c.bf16 %v108, %v107
    %v150 = vpack.c.bf16 %v110, %v109
    %v151 = vpack.c.bf16 %v112, %v111
    %v152 = vpack.c.bf16 %v114, %v113
    %v153 = vpack.c.bf16 %v116, %v115
    %v154 = vpack.c.bf16 %v118, %v117
    %v155 = vpack.c.bf16 %v120, %v119
    %v156 = vpack.c.bf16 %v122, %v121
    %v157 = vpack.c.bf16 %v124, %v123
    %v158 = vpack.c.bf16 %v126, %v125
    %v159 = vld [vmem:[#allocation5] sm:$0xff]
    %v160 = vld [vmem:[#allocation5 + $0x8] sm:$0xff]
    %v161 = vld [vmem:[#allocation5 + $0x10] sm:$0xff]
    %v162 = vld [vmem:[#allocation5 + $0x18] sm:$0xff]
    %v163 = vld [vmem:[#allocation5 + $0x20] sm:$0xff]
    %v164 = vld [vmem:[#allocation5 + $0x28] sm:$0xff]
    %v165 = vld [vmem:[#allocation5 + $0x30] sm:$0xff]
    %v166 = vld [vmem:[#allocation5 + $0x38] sm:$0xff]
    %v167 = vld [vmem:[#allocation5 + $0x40] sm:$0xff]
    %v168 = vld [vmem:[#allocation5 + $0x48] sm:$0xff]
    %v169 = vld [vmem:[#allocation5 + $0x50] sm:$0xff]
    %v170 = vld [vmem:[#allocation5 + $0x58] sm:$0xff]
    %v171 = vld [vmem:[#allocation5 + $0x60] sm:$0xff]
    %v172 = vld [vmem:[#allocation5 + $0x68] sm:$0xff]
    %v173 = vld [vmem:[#allocation5 + $0x70] sm:$0xff]
    %v174 = vld [vmem:[#allocation5 + $0x78] sm:$0xff]
    %v191 = vunpack.c.l.b16 %v159
    %v192 = vunpack.c.h.b16 %v159
    %v193 = vunpack.c.l.b16 %v160
    %v194 = vunpack.c.h.b16 %v160
    %v195 = vunpack.c.l.b16 %v161
    %v196 = vunpack.c.h.b16 %v161
    %v197 = vunpack.c.l.b16 %v162
    %v198 = vunpack.c.h.b16 %v162
    %v199 = vunpack.c.l.b16 %v163
    %v200 = vunpack.c.h.b16 %v163
    %v201 = vunpack.c.l.b16 %v164
    %v202 = vunpack.c.h.b16 %v164
    %v203 = vunpack.c.l.b16 %v165
    %v204 = vunpack.c.h.b16 %v165
    %v205 = vunpack.c.l.b16 %v166
    %v206 = vunpack.c.h.b16 %v166
    %v207 = vunpack.c.l.b16 %v167
    %v208 = vunpack.c.h.b16 %v167
    %v209 = vunpack.c.l.b16 %v168
    %v210 = vunpack.c.h.b16 %v168
    %v211 = vunpack.c.l.b16 %v169
    %v212 = vunpack.c.h.b16 %v169
    %v213 = vunpack.c.l.b16 %v170
    %v214 = vunpack.c.h.b16 %v170
    %v215 = vunpack.c.l.b16 %v171
    %v216 = vunpack.c.h.b16 %v171
    %v217 = vunpack.c.l.b16 %v172
    %v218 = vunpack.c.h.b16 %v172
    %v219 = vunpack.c.l.b16 %v173
    %v220 = vunpack.c.h.b16 %v173
    %v221 = vunpack.c.l.b16 %v174
    %v222 = vunpack.c.h.b16 %v174
    %v223 = vpack.c.b16 %v193, %v191
    %v224 = vpack.c.b16 %v194, %v192
    %v225 = vpack.c.b16 %v197, %v195
    %v226 = vpack.c.b16 %v198, %v196
    %v227 = vpack.c.b16 %v201, %v199
    %v228 = vpack.c.b16 %v202, %v200
    %v229 = vpack.c.b16 %v205, %v203
    %v230 = vpack.c.b16 %v206, %v204
    %v231 = vpack.c.b16 %v209, %v207
    %v232 = vpack.c.b16 %v210, %v208
    %v233 = vpack.c.b16 %v213, %v211
    %v234 = vpack.c.b16 %v214, %v212
    %v235 = vpack.c.b16 %v217, %v215
    %v236 = vpack.c.b16 %v218, %v216
    %v237 = vpack.c.b16 %v221, %v219
    %v238 = vpack.c.b16 %v222, %v220
    %255 = vmatprep.subr.bf16.mxu0 %v224
    %256 = vmatpush1.bf16.msra.mxu0 %v223
    %257 = vmatprep.subr.bf16.mxu0 %v226
    %258 = vmatpush1.bf16.msra.mxu0 %v225
    %259 = vmatprep.subr.bf16.mxu0 %v228
    %260 = vmatpush1.bf16.msra.mxu0 %v227
    %261 = vmatprep.subr.bf16.mxu0 %v230
    %262 = vmatpush1.bf16.msra.mxu0 %v229
    %263 = vmatprep.subr.bf16.mxu0 %v232
    %264 = vmatpush1.bf16.msra.mxu0 %v231
    %265 = vmatprep.subr.bf16.mxu0 %v234
    %266 = vmatpush1.bf16.msra.mxu0 %v233
    %267 = vmatprep.subr.bf16.mxu0 %v236
    %268 = vmatpush1.bf16.msra.mxu0 %v235
    %269 = vmatprep.subr.bf16.mxu0 %v238
    %270 = vmatpush1.bf16.msra.mxu0 %v237
    %271 = vmatprep.subr.bf16.mxu0 0
    %272 = vmatpush1.bf16.msra.mxu0 0
    %273 = vmatprep.subr.bf16.mxu0 0
    %274 = vmatpush1.bf16.msra.mxu0 0
    %275 = vmatprep.subr.bf16.mxu0 0
    %276 = vmatpush1.bf16.msra.mxu0 0
    %277 = vmatprep.subr.bf16.mxu0 0
    %278 = vmatpush1.bf16.msra.mxu0 0
    %279 = vmatprep.subr.bf16.mxu0 0
    %280 = vmatpush1.bf16.msra.mxu0 0
    %281 = vmatprep.subr.bf16.mxu0 0
    %282 = vmatpush1.bf16.msra.mxu0 0
    %283 = vmatprep.subr.bf16.mxu0 0
    %284 = vmatpush1.bf16.msra.mxu0 0
    %285 = vmatprep.subr.bf16.mxu0 0
    %286 = vmatpush1.bf16.msra.mxu0 0
    %287 = vmatprep.mubr.bf16.mxu0 0
    %288 = vmatmul.mubr.bf16.gmra.mrb[0].mxu0 %v127
    %v289 = vpop.f32.mrb[0].mxu0
    %v290 = vadd.f32 0.0, %v289
    %v291 = vpop.f32.mrb[0].mxu0
    %v292 = vadd.f32 0.0, %v291
    %v293 = vpop.f32.mrb[0].mxu0
    %v294 = vadd.f32 0.0, %v293
    %v295 = vpop.f32.mrb[0].mxu0
    %v296 = vadd.f32 0.0, %v295
    %297 = vmatprep.mubr.bf16.mxu0 0
    %298 = vmatmul.mubr.bf16.gmra.mrb[0].mxu0 %v128
    %v299 = vpop.f32.mrb[0].mxu0
    %v300 = vadd.f32 0.0, %v299
    %v301 = vpop.f32.mrb[0].mxu0
    %v302 = vadd.f32 0.0, %v301
    %v303 = vpop.f32.mrb[0].mxu0
    %v304 = vadd.f32 0.0, %v303
    %v305 = vpop.f32.mrb[0].mxu0
    %v306 = vadd.f32 0.0, %v305
    %307 = vmatprep.mubr.bf16.mxu0 0
    %308 = vmatmul.mubr.bf16.gmra.mrb[0].mxu0 %v129
    %v309 = vpop.f32.mrb[0].mxu0
    %v310 = vadd.f32 0.0, %v309
    %v311 = vpop.f32.mrb[0].mxu0
    %v312 = vadd.f32 0.0, %v311
    %v313 = vpop.f32.mrb[0].mxu0
    %v314 = vadd.f32 0.0, %v313
    %v315 = vpop.f32.mrb[0].mxu0
    %v316 = vadd.f32 0.0, %v315
    %317 = vmatprep.mubr.bf16.mxu0 0
    %318 = vmatmul.mubr.bf16.gmra.mrb[0].mxu0 %v130
    %v319 = vpop.f32.mrb[0].mxu0
    %v320 = vadd.f32 0.0, %v319
    %v321 = vpop.f32.mrb[0].mxu0
    %v322 = vadd.f32 0.0, %v321
    %v323 = vpop.f32.mrb[0].mxu0
    %v324 = vadd.f32 0.0, %v323
    %v325 = vpop.f32.mrb[0].mxu0
    %v326 = vadd.f32 0.0, %v325
    %327 = vmatprep.mubr.bf16.mxu0 0
    %328 = vmatmul.mubr.bf16.gmra.mrb[0].mxu0 %v131
    %v329 = vpop.f32.mrb[0].mxu0
    %v330 = vadd.f32 0.0, %v329
    %v331 = vpop.f32.mrb[0].mxu0
    %v332 = vadd.f32 0.0, %v331
    %v333 = vpop.f32.mrb[0].mxu0
    %v334 = vadd.f32 0.0, %v333
    %v335 = vpop.f32.mrb[0].mxu0
    %v336 = vadd.f32 0.0, %v335
    %337 = vmatprep.mubr.bf16.mxu0 0
    %338 = vmatmul.mubr.bf16.gmra.mrb[0].mxu0 %v132
    %v339 = vpop.f32.mrb[0].mxu0
    %v340 = vadd.f32 0.0, %v339
    %v341 = vpop.f32.mrb[0].mxu0
    %v342 = vadd.f32 0.0, %v341
    %v343 = vpop.f32.mrb[0].mxu0
    %v344 = vadd.f32 0.0, %v343
    %v345 = vpop.f32.mrb[0].mxu0
    %v346 = vadd.f32 0.0, %v345
    %347 = vmatprep.mubr.bf16.mxu0 0
    %348 = vmatmul.mubr.bf16.gmra.mrb[0].mxu0 %v133
    %v349 = vpop.f32.mrb[0].mxu0
    %v350 = vadd.f32 0.0, %v349
    %v351 = vpop.f32.mrb[0].mxu0
    %v352 = vadd.f32 0.0, %v351
    %v353 = vpop.f32.mrb[0].mxu0
    %v354 = vadd.f32 0.0, %v353
    %v355 = vpop.f32.mrb[0].mxu0
    %v356 = vadd.f32 0.0, %v355
    %357 = vmatprep.mubr.bf16.mxu0 0
    %358 = vmatmul.mubr.bf16.gmra.mrb[0].mxu0 %v134
    %v359 = vpop.f32.mrb[0].mxu0
    %v360 = vadd.f32 0.0, %v359
    %v361 = vpop.f32.mrb[0].mxu0
    %v362 = vadd.f32 0.0, %v361
    %v363 = vpop.f32.mrb[0].mxu0
    %v364 = vadd.f32 0.0, %v363
    %v365 = vpop.f32.mrb[0].mxu0
    %v366 = vadd.f32 0.0, %v365
    %367 = vmatprep.mubr.bf16.mxu0 0
    %368 = vmatmul.mubr.bf16.gmra.mrb[0].mxu0 %v135
    %v369 = vpop.f32.mrb[0].mxu0
    %v370 = vadd.f32 0.0, %v369
    %v371 = vpop.f32.mrb[0].mxu0
    %v372 = vadd.f32 0.0, %v371
    %v373 = vpop.f32.mrb[0].mxu0
    %v374 = vadd.f32 0.0, %v373
    %v375 = vpop.f32.mrb[0].mxu0
    %v376 = vadd.f32 0.0, %v375
    %377 = vmatprep.mubr.bf16.mxu0 0
    %378 = vmatmul.mubr.bf16.gmra.mrb[0].mxu0 %v136
    %v379 = vpop.f32.mrb[0].mxu0
    %v380 = vadd.f32 0.0, %v379
    %v381 = vpop.f32.mrb[0].mxu0
    %v382 = vadd.f32 0.0, %v381
    %v383 = vpop.f32.mrb[0].mxu0
    %v384 = vadd.f32 0.0, %v383
    %v385 = vpop.f32.mrb[0].mxu0
    %v386 = vadd.f32 0.0, %v385
    %387 = vmatprep.mubr.bf16.mxu0 0
    %388 = vmatmul.mubr.bf16.gmra.mrb[0].mxu0 %v137
    %v389 = vpop.f32.mrb[0].mxu0
    %v390 = vadd.f32 0.0, %v389
    %v391 = vpop.f32.mrb[0].mxu0
    %v392 = vadd.f32 0.0, %v391
    %v393 = vpop.f32.mrb[0].mxu0
    %v394 = vadd.f32 0.0, %v393
    %v395 = vpop.f32.mrb[0].mxu0
    %v396 = vadd.f32 0.0, %v395
    %397 = vmatprep.mubr.bf16.mxu0 0
    %398 = vmatmul.mubr.bf16.gmra.mrb[0].mxu0 %v138
    %v399 = vpop.f32.mrb[0].mxu0
    %v400 = vadd.f32 0.0, %v399
    %v401 = vpop.f32.mrb[0].mxu0
    %v402 = vadd.f32 0.0, %v401
    %v403 = vpop.f32.mrb[0].mxu0
    %v404 = vadd.f32 0.0, %v403
    %v405 = vpop.f32.mrb[0].mxu0
    %v406 = vadd.f32 0.0, %v405
    %407 = vmatprep.mubr.bf16.mxu0 0
    %408 = vmatmul.mubr.bf16.gmra.mrb[0].mxu0 %v139
    %v409 = vpop.f32.mrb[0].mxu0
    %v410 = vadd.f32 0.0, %v409
    %v411 = vpop.f32.mrb[0].mxu0
    %v412 = vadd.f32 0.0, %v411
    %v413 = vpop.f32.mrb[0].mxu0
    %v414 = vadd.f32 0.0, %v413
    %v415 = vpop.f32.mrb[0].mxu0
    %v416 = vadd.f32 0.0, %v415
    %417 = vmatprep.mubr.bf16.mxu0 0
    %418 = vmatmul.mubr.bf16.gmra.mrb[0].mxu0 %v140
    %v419 = vpop.f32.mrb[0].mxu0
    %v420 = vadd.f32 0.0, %v419
    %v421 = vpop.f32.mrb[0].mxu0
    %v422 = vadd.f32 0.0, %v421
    %v423 = vpop.f32.mrb[0].mxu0
    %v424 = vadd.f32 0.0, %v423
    %v425 = vpop.f32.mrb[0].mxu0
    %v426 = vadd.f32 0.0, %v425
    %427 = vmatprep.mubr.bf16.mxu0 0
    %428 = vmatmul.mubr.bf16.gmra.mrb[0].mxu0 %v141
    %v429 = vpop.f32.mrb[0].mxu0
    %v430 = vadd.f32 0.0, %v429
    %v431 = vpop.f32.mrb[0].mxu0
    %v432 = vadd.f32 0.0, %v431
    %v433 = vpop.f32.mrb[0].mxu0
    %v434 = vadd.f32 0.0, %v433
    %v435 = vpop.f32.mrb[0].mxu0
    %v436 = vadd.f32 0.0, %v435
    %437 = vmatprep.mubr.bf16.mxu0 0
    %438 = vmatmul.mubr.bf16.gmra.mrb[0].mxu0 %v142
    %v439 = vpop.f32.mrb[0].mxu0
    %v440 = vadd.f32 0.0, %v439
    %v441 = vpop.f32.mrb[0].mxu0
    %v442 = vadd.f32 0.0, %v441
    %v443 = vpop.f32.mrb[0].mxu0
    %v444 = vadd.f32 0.0, %v443
    %v445 = vpop.f32.mrb[0].mxu0
    %v446 = vadd.f32 0.0, %v445
    %447 = vmatprep.mubr.bf16.mxu0 0
    %448 = vmatmul.mubr.bf16.gmra.mrb[0].mxu0 %v143
    %v449 = vpop.f32.mrb[0].mxu0
    %v450 = vadd.f32 0.0, %v449
    %v451 = vpop.f32.mrb[0].mxu0
    %v452 = vadd.f32 0.0, %v451
    %v453 = vpop.f32.mrb[0].mxu0
    %v454 = vadd.f32 0.0, %v453
    %v455 = vpop.f32.mrb[0].mxu0
    %v456 = vadd.f32 0.0, %v455
    %457 = vmatprep.mubr.bf16.mxu0 0
    %458 = vmatmul.mubr.bf16.gmra.mrb[0].mxu0 %v144
    %v459 = vpop.f32.mrb[0].mxu0
    %v460 = vadd.f32 0.0, %v459
    %v461 = vpop.f32.mrb[0].mxu0
    %v462 = vadd.f32 0.0, %v461
    %v463 = vpop.f32.mrb[0].mxu0
    %v464 = vadd.f32 0.0, %v463
    %v465 = vpop.f32.mrb[0].mxu0
    %v466 = vadd.f32 0.0, %v465
    %467 = vmatprep.mubr.bf16.mxu0 0
    %468 = vmatmul.mubr.bf16.gmra.mrb[0].mxu0 %v145
    %v469 = vpop.f32.mrb[0].mxu0
    %v470 = vadd.f32 0.0, %v469
    %v471 = vpop.f32.mrb[0].mxu0
    %v472 = vadd.f32 0.0, %v471
    %v473 = vpop.f32.mrb[0].mxu0
    %v474 = vadd.f32 0.0, %v473
    %v475 = vpop.f32.mrb[0].mxu0
    %v476 = vadd.f32 0.0, %v475
    %477 = vmatprep.mubr.bf16.mxu0 0
    %478 = vmatmul.mubr.bf16.gmra.mrb[0].mxu0 %v146
    %v479 = vpop.f32.mrb[0].mxu0
    %v480 = vadd.f32 0.0, %v479
    %v481 = vpop.f32.mrb[0].mxu0
    %v482 = vadd.f32 0.0, %v481
    %v483 = vpop.f32.mrb[0].mxu0
    %v484 = vadd.f32 0.0, %v483
    %v485 = vpop.f32.mrb[0].mxu0
    %v486 = vadd.f32 0.0, %v485
    %487 = vmatprep.mubr.bf16.mxu0 0
    %488 = vmatmul.mubr.bf16.gmra.mrb[0].mxu0 %v147
    %v489 = vpop.f32.mrb[0].mxu0
    %v490 = vadd.f32 0.0, %v489
    %v491 = vpop.f32.mrb[0].mxu0
    %v492 = vadd.f32 0.0, %v491
    %v493 = vpop.f32.mrb[0].mxu0
    %v494 = vadd.f32 0.0, %v493
    %v495 = vpop.f32.mrb[0].mxu0
    %v496 = vadd.f32 0.0, %v495
    %497 = vmatprep.mubr.bf16.mxu0 0
    %498 = vmatmul.mubr.bf16.gmra.mrb[0].mxu0 %v148
    %v499 = vpop.f32.mrb[0].mxu0
    %v500 = vadd.f32 0.0, %v499
    %v501 = vpop.f32.mrb[0].mxu0
    %v502 = vadd.f32 0.0, %v501
    %v503 = vpop.f32.mrb[0].mxu0
    %v504 = vadd.f32 0.0, %v503
    %v505 = vpop.f32.mrb[0].mxu0
    %v506 = vadd.f32 0.0, %v505
    %507 = vmatprep.mubr.bf16.mxu0 0
    %508 = vmatmul.mubr.bf16.gmra.mrb[0].mxu0 %v149
    %v509 = vpop.f32.mrb[0].mxu0
    %v510 = vadd.f32 0.0, %v509
    %v511 = vpop.f32.mrb[0].mxu0
    %v512 = vadd.f32 0.0, %v511
    %v513 = vpop.f32.mrb[0].mxu0
    %v514 = vadd.f32 0.0, %v513
    %v515 = vpop.f32.mrb[0].mxu0
    %v516 = vadd.f32 0.0, %v515
    %517 = vmatprep.mubr.bf16.mxu0 0
    %518 = vmatmul.mubr.bf16.gmra.mrb[0].mxu0 %v150
    %v519 = vpop.f32.mrb[0].mxu0
    %v520 = vadd.f32 0.0, %v519
    %v521 = vpop.f32.mrb[0].mxu0
    %v522 = vadd.f32 0.0, %v521
    %v523 = vpop.f32.mrb[0].mxu0
    %v524 = vadd.f32 0.0, %v523
    %v525 = vpop.f32.mrb[0].mxu0
    %v526 = vadd.f32 0.0, %v525
    %527 = vmatprep.mubr.bf16.mxu0 0
    %528 = vmatmul.mubr.bf16.gmra.mrb[0].mxu0 %v151
    %v529 = vpop.f32.mrb[0].mxu0
    %v530 = vadd.f32 0.0, %v529
    %v531 = vpop.f32.mrb[0].mxu0
    %v532 = vadd.f32 0.0, %v531
    %v533 = vpop.f32.mrb[0].mxu0
    %v534 = vadd.f32 0.0, %v533
    %v535 = vpop.f32.mrb[0].mxu0
    %v536 = vadd.f32 0.0, %v535
    %537 = vmatprep.mubr.bf16.mxu0 0
    %538 = vmatmul.mubr.bf16.gmra.mrb[0].mxu0 %v152
    %v539 = vpop.f32.mrb[0].mxu0
    %v540 = vadd.f32 0.0, %v539
    %v541 = vpop.f32.mrb[0].mxu0
    %v542 = vadd.f32 0.0, %v541
    %v543 = vpop.f32.mrb[0].mxu0
    %v544 = vadd.f32 0.0, %v543
    %v545 = vpop.f32.mrb[0].mxu0
    %v546 = vadd.f32 0.0, %v545
    %547 = vmatprep.mubr.bf16.mxu0 0
    %548 = vmatmul.mubr.bf16.gmra.mrb[0].mxu0 %v153
    %v549 = vpop.f32.mrb[0].mxu0
    %v550 = vadd.f32 0.0, %v549
    %v551 = vpop.f32.mrb[0].mxu0
    %v552 = vadd.f32 0.0, %v551
    %v553 = vpop.f32.mrb[0].mxu0
    %v554 = vadd.f32 0.0, %v553
    %v555 = vpop.f32.mrb[0].mxu0
    %v556 = vadd.f32 0.0, %v555
    %557 = vmatprep.mubr.bf16.mxu0 0
    %558 = vmatmul.mubr.bf16.gmra.mrb[0].mxu0 %v154
    %v559 = vpop.f32.mrb[0].mxu0
    %v560 = vadd.f32 0.0, %v559
    %v561 = vpop.f32.mrb[0].mxu0
    %v562 = vadd.f32 0.0, %v561
    %v563 = vpop.f32.mrb[0].mxu0
    %v564 = vadd.f32 0.0, %v563
    %v565 = vpop.f32.mrb[0].mxu0
    %v566 = vadd.f32 0.0, %v565
    %567 = vmatprep.mubr.bf16.mxu0 0
    %568 = vmatmul.mubr.bf16.gmra.mrb[0].mxu0 %v155
    %v569 = vpop.f32.mrb[0].mxu0
    %v570 = vadd.f32 0.0, %v569
    %v571 = vpop.f32.mrb[0].mxu0
    %v572 = vadd.f32 0.0, %v571
    %v573 = vpop.f32.mrb[0].mxu0
    %v574 = vadd.f32 0.0, %v573
    %v575 = vpop.f32.mrb[0].mxu0
    %v576 = vadd.f32 0.0, %v575
    %577 = vmatprep.mubr.bf16.mxu0 0
    %578 = vmatmul.mubr.bf16.gmra.mrb[0].mxu0 %v156
    %v579 = vpop.f32.mrb[0].mxu0
    %v580 = vadd.f32 0.0, %v579
    %v581 = vpop.f32.mrb[0].mxu0
    %v582 = vadd.f32 0.0, %v581
    %v583 = vpop.f32.mrb[0].mxu0
    %v584 = vadd.f32 0.0, %v583
    %v585 = vpop.f32.mrb[0].mxu0
    %v586 = vadd.f32 0.0, %v585
    %587 = vmatprep.mubr.bf16.mxu0 0
    %588 = vmatmul.mubr.bf16.gmra.mrb[0].mxu0 %v157
    %v589 = vpop.f32.mrb[0].mxu0
    %v590 = vadd.f32 0.0, %v589
    %v591 = vpop.f32.mrb[0].mxu0
    %v592 = vadd.f32 0.0, %v591
    %v593 = vpop.f32.mrb[0].mxu0
    %v594 = vadd.f32 0.0, %v593
    %v595 = vpop.f32.mrb[0].mxu0
    %v596 = vadd.f32 0.0, %v595
    %597 = vmatprep.mubr.bf16.mxu0 0
    %598 = vmatmul.mubr.bf16.gmra.mrb[0].mxu0 %v158
    %v599 = vpop.f32.mrb[0].mxu0
    %v600 = vadd.f32 0.0, %v599
    %v601 = vpop.f32.mrb[0].mxu0
    %v602 = vadd.f32 0.0, %v601
    %v603 = vpop.f32.mrb[0].mxu0
    %v604 = vadd.f32 0.0, %v603
    %v605 = vpop.f32.mrb[0].mxu0
    %v606 = vadd.f32 0.0, %v605
    %607 = vdwg.mxu0
    %v608 = vld [vmem:[%s2] sm:$0x3]
    %v609 = vpack.c.bf16 %v294, %v290
    %v610 = vpack.c.bf16 %v296, %v292
    %v611 = vpack.c.bf16 %v304, %v300
    %v612 = vpack.c.bf16 %v306, %v302
    %v613 = vpack.c.bf16 %v314, %v310
    %v614 = vpack.c.bf16 %v316, %v312
    %v615 = vpack.c.bf16 %v324, %v320
    %v616 = vpack.c.bf16 %v326, %v322
    %v617 = vpack.c.bf16 %v334, %v330
    %v618 = vpack.c.bf16 %v336, %v332
    %v619 = vpack.c.bf16 %v344, %v340
    %v620 = vpack.c.bf16 %v346, %v342
    %v621 = vpack.c.bf16 %v354, %v350
    %v622 = vpack.c.bf16 %v356, %v352
    %v623 = vpack.c.bf16 %v364, %v360
    %v624 = vpack.c.bf16 %v366, %v362
    %v625 = vpack.c.bf16 %v374, %v370
    %v626 = vpack.c.bf16 %v376, %v372
    %v627 = vpack.c.bf16 %v384, %v380
    %v628 = vpack.c.bf16 %v386, %v382
    %v629 = vpack.c.bf16 %v394, %v390
    %v630 = vpack.c.bf16 %v396, %v392
    %v631 = vpack.c.bf16 %v404, %v400
    %v632 = vpack.c.bf16 %v406, %v402
    %v633 = vpack.c.bf16 %v414, %v410
    %v634 = vpack.c.bf16 %v416, %v412
    %v635 = vpack.c.bf16 %v424, %v420
    %v636 = vpack.c.bf16 %v426, %v422
    %v637 = vpack.c.bf16 %v434, %v430
    %v638 = vpack.c.bf16 %v436, %v432
    %v639 = vpack.c.bf16 %v444, %v440
    %v640 = vpack.c.bf16 %v446, %v442
    %v641 = vpack.c.bf16 %v454, %v450
    %v642 = vpack.c.bf16 %v456, %v452
    %v643 = vpack.c.bf16 %v464, %v460
    %v644 = vpack.c.bf16 %v466, %v462
    %v645 = vpack.c.bf16 %v474, %v470
    %v646 = vpack.c.bf16 %v476, %v472
    %v647 = vpack.c.bf16 %v484, %v480
    %v648 = vpack.c.bf16 %v486, %v482
    %v649 = vpack.c.bf16 %v494, %v490
    %v650 = vpack.c.bf16 %v496, %v492
    %v651 = vpack.c.bf16 %v504, %v500
    %v652 = vpack.c.bf16 %v506, %v502
    %v653 = vpack.c.bf16 %v514, %v510
    %v654 = vpack.c.bf16 %v516, %v512
    %v655 = vpack.c.bf16 %v524, %v520
    %v656 = vpack.c.bf16 %v526, %v522
    %v657 = vpack.c.bf16 %v534, %v530
    %v658 = vpack.c.bf16 %v536, %v532
    %v659 = vpack.c.bf16 %v544, %v540
    %v660 = vpack.c.bf16 %v546, %v542
    %v661 = vpack.c.bf16 %v554, %v550
    %v662 = vpack.c.bf16 %v556, %v552
    %v663 = vpack.c.bf16 %v564, %v560
    %v664 = vpack.c.bf16 %v566, %v562
    %v665 = vpack.c.bf16 %v574, %v570
    %v666 = vpack.c.bf16 %v576, %v572
    %v667 = vpack.c.bf16 %v584, %v580
    %v668 = vpack.c.bf16 %v586, %v582
    %v669 = vpack.c.bf16 %v594, %v590
    %v670 = vpack.c.bf16 %v596, %v592
    %v671 = vpack.c.bf16 %v604, %v600
    %v672 = vpack.c.bf16 %v606, %v602
    %v675 = vunpack.c.l.s4 1966171168
    %v676 = vunpack.c.0.s8 %v675
    %v677 = vlaneseq
    %v678 = vshrl.u32 %v677, 7
    %v679 = vsub.s32 %v676, %v678
    %v680 = vrot.slane %v608, %v679
    %v681 = vcombine.high %v680, %v680
    %v683 = vunpack.c.l.s4 1966171168
    %v684 = vunpack.c.0.s8 %v683
    %v685 = vlaneseq
    %v686 = vshrl.u32 %v685, 7
    %v687 = vsub.s32 %v684, %v686
    %v688 = vrot.slane %v680, %v687
    %v690 = vunpack.c.l.s4 1966171168
    %v691 = vunpack.c.0.s8 %v690
    %v692 = vlaneseq
    %v693 = vshrl.u32 %v692, 7
    %v694 = vsub.s32 %v691, %v693
    %v695 = vrot.slane %v681, %v694
    %v697 = vpack.i.b16 %v688, %v688
    %v699 = vlaneseq
    %v700 = vshrl.u32 %v699, 7
    %v701 = vsub.s32 0, %v700
    %v702 = vrot.slane %v697, %v701
    %v704 = vpack.i.b16 %v695, %v695
    %v706 = vlaneseq
    %v707 = vshrl.u32 %v706, 7
    %v708 = vsub.s32 0, %v707
    %v709 = vrot.slane %v704, %v708
    %v710 = vadd.bf16 %v609, %v702
    %v711 = vadd.bf16 %v610, %v709
    %v712 = vadd.bf16 %v611, %v702
    %v713 = vadd.bf16 %v612, %v709
    %v714 = vadd.bf16 %v613, %v702
    %v715 = vadd.bf16 %v614, %v709
    %v716 = vadd.bf16 %v615, %v702
    %v717 = vadd.bf16 %v616, %v709
    %v718 = vadd.bf16 %v617, %v702
    %v719 = vadd.bf16 %v618, %v709
    %v720 = vadd.bf16 %v619, %v702
    %v721 = vadd.bf16 %v620, %v709
    %v722 = vadd.bf16 %v621, %v702
    %v723 = vadd.bf16 %v622, %v709
    %v724 = vadd.bf16 %v623, %v702
    %v725 = vadd.bf16 %v624, %v709
    %v726 = vadd.bf16 %v625, %v702
    %v727 = vadd.bf16 %v626, %v709
    %v728 = vadd.bf16 %v627, %v702
    %v729 = vadd.bf16 %v628, %v709
    %v730 = vadd.bf16 %v629, %v702
    %v731 = vadd.bf16 %v630, %v709
    %v732 = vadd.bf16 %v631, %v702
    %v733 = vadd.bf16 %v632, %v709
    %v734 = vadd.bf16 %v633, %v702
    %v735 = vadd.bf16 %v634, %v709
    %v736 = vadd.bf16 %v635, %v702
    %v737 = vadd.bf16 %v636, %v709
    %v738 = vadd.bf16 %v637, %v702
    %v739 = vadd.bf16 %v638, %v709
    %v740 = vadd.bf16 %v639, %v702
    %v741 = vadd.bf16 %v640, %v709
    %v742 = vadd.bf16 %v641, %v702
    %v743 = vadd.bf16 %v642, %v709
    %v744 = vadd.bf16 %v643, %v702
    %v745 = vadd.bf16 %v644, %v709
    %v746 = vadd.bf16 %v645, %v702
    %v747 = vadd.bf16 %v646, %v709
    %v748 = vadd.bf16 %v647, %v702
    %v749 = vadd.bf16 %v648, %v709
    %v750 = vadd.bf16 %v649, %v702
    %v751 = vadd.bf16 %v650, %v709
    %v752 = vadd.bf16 %v651, %v702
    %v753 = vadd.bf16 %v652, %v709
    %v754 = vadd.bf16 %v653, %v702
    %v755 = vadd.bf16 %v654, %v709
    %v756 = vadd.bf16 %v655, %v702
    %v757 = vadd.bf16 %v656, %v709
    %v758 = vadd.bf16 %v657, %v702
    %v759 = vadd.bf16 %v658, %v709
    %v760 = vadd.bf16 %v659, %v702
    %v761 = vadd.bf16 %v660, %v709
    %v762 = vadd.bf16 %v661, %v702
    %v763 = vadd.bf16 %v662, %v709
    %v764 = vadd.bf16 %v663, %v702
    %v765 = vadd.bf16 %v664, %v709
    %v766 = vadd.bf16 %v665, %v702
    %v767 = vadd.bf16 %v666, %v709
    %v768 = vadd.bf16 %v667, %v702
    %v769 = vadd.bf16 %v668, %v709
    %v770 = vadd.bf16 %v669, %v702
    %v771 = vadd.bf16 %v670, %v709
    %v772 = vadd.bf16 %v671, %v702
    %v773 = vadd.bf16 %v672, %v709
    %v774 = vmax.bf16 %v710, 0
    %v775 = vmax.bf16 %v711, 0
    %v776 = vmax.bf16 %v712, 0
    %v777 = vmax.bf16 %v713, 0
    %v778 = vmax.bf16 %v714, 0
    %v779 = vmax.bf16 %v715, 0
    %v780 = vmax.bf16 %v716, 0
    %v781 = vmax.bf16 %v717, 0
    %v782 = vmax.bf16 %v718, 0
    %v783 = vmax.bf16 %v719, 0
    %v784 = vmax.bf16 %v720, 0
    %v785 = vmax.bf16 %v721, 0
    %v786 = vmax.bf16 %v722, 0
    %v787 = vmax.bf16 %v723, 0
    %v788 = vmax.bf16 %v724, 0
    %v789 = vmax.bf16 %v725, 0
    %v790 = vmax.bf16 %v726, 0
    %v791 = vmax.bf16 %v727, 0
    %v792 = vmax.bf16 %v728, 0
    %v793 = vmax.bf16 %v729, 0
    %v794 = vmax.bf16 %v730, 0
    %v795 = vmax.bf16 %v731, 0
    %v796 = vmax.bf16 %v732, 0
    %v797 = vmax.bf16 %v733, 0
    %v798 = vmax.bf16 %v734, 0
    %v799 = vmax.bf16 %v735, 0
    %v800 = vmax.bf16 %v736, 0
    %v801 = vmax.bf16 %v737, 0
    %v802 = vmax.bf16 %v738, 0
    %v803 = vmax.bf16 %v739, 0
    %v804 = vmax.bf16 %v740, 0
    %v805 = vmax.bf16 %v741, 0
    %v806 = vmax.bf16 %v742, 0
    %v807 = vmax.bf16 %v743, 0
    %v808 = vmax.bf16 %v744, 0
    %v809 = vmax.bf16 %v745, 0
    %v810 = vmax.bf16 %v746, 0
    %v811 = vmax.bf16 %v747, 0
    %v812 = vmax.bf16 %v748, 0
    %v813 = vmax.bf16 %v749, 0
    %v814 = vmax.bf16 %v750, 0
    %v815 = vmax.bf16 %v751, 0
    %v816 = vmax.bf16 %v752, 0
    %v817 = vmax.bf16 %v753, 0
    %v818 = vmax.bf16 %v754, 0
    %v819 = vmax.bf16 %v755, 0
    %v820 = vmax.bf16 %v756, 0
    %v821 = vmax.bf16 %v757, 0
    %v822 = vmax.bf16 %v758, 0
    %v823 = vmax.bf16 %v759, 0
    %v824 = vmax.bf16 %v760, 0
    %v825 = vmax.bf16 %v761, 0
    %v826 = vmax.bf16 %v762, 0
    %v827 = vmax.bf16 %v763, 0
    %v828 = vmax.bf16 %v764, 0
    %v829 = vmax.bf16 %v765, 0
    %v830 = vmax.bf16 %v766, 0
    %v831 = vmax.bf16 %v767, 0
    %v832 = vmax.bf16 %v768, 0
    %v833 = vmax.bf16 %v769, 0
    %v834 = vmax.bf16 %v770, 0
    %v835 = vmax.bf16 %v771, 0
    %v836 = vmax.bf16 %v772, 0
    %v837 = vmax.bf16 %v773, 0
    %v838 = vld [vmem:[#allocation7] sm:$0xf]
    %v839 = vld [vmem:[#allocation7 + $0x4] sm:$0xf]
    %v840 = vld [vmem:[#allocation7 + $0x8] sm:$0xf]
    %v841 = vld [vmem:[#allocation7 + $0xc] sm:$0xf]
    %v842 = vld [vmem:[#allocation7 + $0x10] sm:$0xf]
    %v843 = vld [vmem:[#allocation7 + $0x14] sm:$0xf]
    %v844 = vld [vmem:[#allocation7 + $0x18] sm:$0xf]
    %v845 = vld [vmem:[#allocation7 + $0x1c] sm:$0xf]
    %v846 = vld [vmem:[#allocation7 + $0x20] sm:$0xf]
    %v847 = vld [vmem:[#allocation7 + $0x24] sm:$0xf]
    %v848 = vld [vmem:[#allocation7 + $0x28] sm:$0xf]
    %v849 = vld [vmem:[#allocation7 + $0x2c] sm:$0xf]
    %v850 = vld [vmem:[#allocation7 + $0x30] sm:$0xf]
    %v851 = vld [vmem:[#allocation7 + $0x34] sm:$0xf]
    %v852 = vld [vmem:[#allocation7 + $0x38] sm:$0xf]
    %v853 = vld [vmem:[#allocation7 + $0x3c] sm:$0xf]
    %v854 = vld [vmem:[#allocation7 + $0x40] sm:$0xf]
    %v855 = vld [vmem:[#allocation7 + $0x44] sm:$0xf]
    %v856 = vld [vmem:[#allocation7 + $0x48] sm:$0xf]
    %v857 = vld [vmem:[#allocation7 + $0x4c] sm:$0xf]
    %v858 = vld [vmem:[#allocation7 + $0x50] sm:$0xf]
    %v859 = vld [vmem:[#allocation7 + $0x54] sm:$0xf]
    %v860 = vld [vmem:[#allocation7 + $0x58] sm:$0xf]
    %v861 = vld [vmem:[#allocation7 + $0x5c] sm:$0xf]
    %v862 = vld [vmem:[#allocation7 + $0x60] sm:$0xf]
    %v863 = vld [vmem:[#allocation7 + $0x64] sm:$0xf]
    %v864 = vld [vmem:[#allocation7 + $0x68] sm:$0xf]
    %v865 = vld [vmem:[#allocation7 + $0x6c] sm:$0xf]
    %v866 = vld [vmem:[#allocation7 + $0x70] sm:$0xf]
    %v867 = vld [vmem:[#allocation7 + $0x74] sm:$0xf]
    %v868 = vld [vmem:[#allocation7 + $0x78] sm:$0xf]
    %v869 = vld [vmem:[#allocation7 + $0x7c] sm:$0xf]
    %v870 = vld [vmem:[%s4] sm:$0x1]
    %v872 = vlaneseq
    %v873 = vshrl.u32 %v872, 7
    %v874 = vsub.s32 0, %v873
    %v875 = vrot.slane %v870, %v874
    %v909 = vunpack.c.l.b16 %v838
    %v910 = vunpack.c.l.b16 %v839
    %v911 = vunpack.c.l.b16 %v840
    %v912 = vunpack.c.l.b16 %v841
    %v913 = vunpack.c.l.b16 %v842
    %v914 = vunpack.c.l.b16 %v843
    %v915 = vunpack.c.l.b16 %v844
    %v916 = vunpack.c.l.b16 %v845
    %v917 = vunpack.c.l.b16 %v846
    %v918 = vunpack.c.l.b16 %v847
    %v919 = vunpack.c.l.b16 %v848
    %v920 = vunpack.c.l.b16 %v849
    %v921 = vunpack.c.l.b16 %v850
    %v922 = vunpack.c.l.b16 %v851
    %v923 = vunpack.c.l.b16 %v852
    %v924 = vunpack.c.l.b16 %v853
    %v925 = vunpack.c.l.b16 %v854
    %v926 = vunpack.c.l.b16 %v855
    %v927 = vunpack.c.l.b16 %v856
    %v928 = vunpack.c.l.b16 %v857
    %v929 = vunpack.c.l.b16 %v858
    %v930 = vunpack.c.l.b16 %v859
    %v931 = vunpack.c.l.b16 %v860
    %v932 = vunpack.c.l.b16 %v861
    %v933 = vunpack.c.l.b16 %v862
    %v934 = vunpack.c.l.b16 %v863
    %v935 = vunpack.c.l.b16 %v864
    %v936 = vunpack.c.l.b16 %v865
    %v937 = vunpack.c.l.b16 %v866
    %v938 = vunpack.c.l.b16 %v867
    %v939 = vunpack.c.l.b16 %v868
    %v940 = vunpack.c.l.b16 %v869
    %v941 = vpack.c.b16 %v910, %v909
    %v942 = vpack.c.b16 %v912, %v911
    %v943 = vpack.c.b16 %v914, %v913
    %v944 = vpack.c.b16 %v916, %v915
    %v945 = vpack.c.b16 %v918, %v917
    %v946 = vpack.c.b16 %v920, %v919
    %v947 = vpack.c.b16 %v922, %v921
    %v948 = vpack.c.b16 %v924, %v923
    %v949 = vpack.c.b16 %v926, %v925
    %v950 = vpack.c.b16 %v928, %v927
    %v951 = vpack.c.b16 %v930, %v929
    %v952 = vpack.c.b16 %v932, %v931
    %v953 = vpack.c.b16 %v934, %v933
    %v954 = vpack.c.b16 %v936, %v935
    %v955 = vpack.c.b16 %v938, %v937
    %v956 = vpack.c.b16 %v940, %v939
    %973 = vmatprep.subr.bf16.mxu0 0
    %974 = vmatpush1.bf16.msra.mxu0 %v941
    %975 = vmatprep.subr.bf16.mxu0 0
    %976 = vmatpush1.bf16.msra.mxu0 %v942
    %977 = vmatprep.subr.bf16.mxu0 0
    %978 = vmatpush1.bf16.msra.mxu0 %v943
    %979 = vmatprep.subr.bf16.mxu0 0
    %980 = vmatpush1.bf16.msra.mxu0 %v944
    %981 = vmatprep.subr.bf16.mxu0 0
    %982 = vmatpush1.bf16.msra.mxu0 %v945
    %983 = vmatprep.subr.bf16.mxu0 0
    %984 = vmatpush1.bf16.msra.mxu0 %v946
    %985 = vmatprep.subr.bf16.mxu0 0
    %986 = vmatpush1.bf16.msra.mxu0 %v947
    %987 = vmatprep.subr.bf16.mxu0 0
    %988 = vmatpush1.bf16.msra.mxu0 %v948
    %989 = vmatprep.subr.bf16.mxu0 0
    %990 = vmatpush1.bf16.msra.mxu0 %v949
    %991 = vmatprep.subr.bf16.mxu0 0
    %992 = vmatpush1.bf16.msra.mxu0 %v950
    %993 = vmatprep.subr.bf16.mxu0 0
    %994 = vmatpush1.bf16.msra.mxu0 %v951
    %995 = vmatprep.subr.bf16.mxu0 0
    %996 = vmatpush1.bf16.msra.mxu0 %v952
    %997 = vmatprep.subr.bf16.mxu0 0
    %998 = vmatpush1.bf16.msra.mxu0 %v953
    %999 = vmatprep.subr.bf16.mxu0 0
    %1000 = vmatpush1.bf16.msra.mxu0 %v954
    %1001 = vmatprep.subr.bf16.mxu0 0
    %1002 = vmatpush1.bf16.msra.mxu0 %v955
    %1003 = vmatprep.subr.bf16.mxu0 0
    %1004 = vmatpush1.bf16.msra.mxu0 %v956
    %1005 = vmatprep.mubr.bf16.mxu0 %v775
    %1006 = vmatmul.mubr.bf16.gmra.mrb[0].mxu0 %v774
    %v1007 = vpop.f32.mrb[0].mxu0
    %v1008 = vadd.f32 %v875, %v1007
    %v1009 = vpop.f32.mrb[0].mxu0
    %v1010 = vpop.f32.mrb[0].mxu0
    %v1011 = vadd.f32 %v875, %v1010
    %v1012 = vpop.f32.mrb[0].mxu0
    %1013 = vmatprep.mubr.bf16.mxu0 %v777
    %1014 = vmatmul.mubr.bf16.gmra.mrb[0].mxu0 %v776
    %v1015 = vpop.f32.mrb[0].mxu0
    %v1016 = vadd.f32 %v875, %v1015
    %v1017 = vpop.f32.mrb[0].mxu0
    %v1018 = vpop.f32.mrb[0].mxu0
    %v1019 = vadd.f32 %v875, %v1018
    %v1020 = vpop.f32.mrb[0].mxu0
    %1021 = vmatprep.mubr.bf16.mxu0 %v779
    %1022 = vmatmul.mubr.bf16.gmra.mrb[0].mxu0 %v778
    %v1023 = vpop.f32.mrb[0].mxu0
    %v1024 = vadd.f32 %v875, %v1023
    %v1025 = vpop.f32.mrb[0].mxu0
    %v1026 = vpop.f32.mrb[0].mxu0
    %v1027 = vadd.f32 %v875, %v1026
    %v1028 = vpop.f32.mrb[0].mxu0
    %1029 = vmatprep.mubr.bf16.mxu0 %v781
    %1030 = vmatmul.mubr.bf16.gmra.mrb[0].mxu0 %v780
    %v1031 = vpop.f32.mrb[0].mxu0
    %v1032 = vadd.f32 %v875, %v1031
    %v1033 = vpop.f32.mrb[0].mxu0
    %v1034 = vpop.f32.mrb[0].mxu0
    %v1035 = vadd.f32 %v875, %v1034
    %v1036 = vpop.f32.mrb[0].mxu0
    %1037 = vmatprep.mubr.bf16.mxu0 %v783
    %1038 = vmatmul.mubr.bf16.gmra.mrb[0].mxu0 %v782
    %v1039 = vpop.f32.mrb[0].mxu0
    %v1040 = vadd.f32 %v875, %v1039
    %v1041 = vpop.f32.mrb[0].mxu0
    %v1042 = vpop.f32.mrb[0].mxu0
    %v1043 = vadd.f32 %v875, %v1042
    %v1044 = vpop.f32.mrb[0].mxu0
    %1045 = vmatprep.mubr.bf16.mxu0 %v785
    %1046 = vmatmul.mubr.bf16.gmra.mrb[0].mxu0 %v784
    %v1047 = vpop.f32.mrb[0].mxu0
    %v1048 = vadd.f32 %v875, %v1047
    %v1049 = vpop.f32.mrb[0].mxu0
    %v1050 = vpop.f32.mrb[0].mxu0
    %v1051 = vadd.f32 %v875, %v1050
    %v1052 = vpop.f32.mrb[0].mxu0
    %1053 = vmatprep.mubr.bf16.mxu0 %v787
    %1054 = vmatmul.mubr.bf16.gmra.mrb[0].mxu0 %v786
    %v1055 = vpop.f32.mrb[0].mxu0
    %v1056 = vadd.f32 %v875, %v1055
    %v1057 = vpop.f32.mrb[0].mxu0
    %v1058 = vpop.f32.mrb[0].mxu0
    %v1059 = vadd.f32 %v875, %v1058
    %v1060 = vpop.f32.mrb[0].mxu0
    %1061 = vmatprep.mubr.bf16.mxu0 %v789
    %1062 = vmatmul.mubr.bf16.gmra.mrb[0].mxu0 %v788
    %v1063 = vpop.f32.mrb[0].mxu0
    %v1064 = vadd.f32 %v875, %v1063
    %v1065 = vpop.f32.mrb[0].mxu0
    %v1066 = vpop.f32.mrb[0].mxu0
    %v1067 = vadd.f32 %v875, %v1066
    %v1068 = vpop.f32.mrb[0].mxu0
    %1069 = vmatprep.mubr.bf16.mxu0 %v791
    %1070 = vmatmul.mubr.bf16.gmra.mrb[0].mxu0 %v790
    %v1071 = vpop.f32.mrb[0].mxu0
    %v1072 = vadd.f32 %v875, %v1071
    %v1073 = vpop.f32.mrb[0].mxu0
    %v1074 = vpop.f32.mrb[0].mxu0
    %v1075 = vadd.f32 %v875, %v1074
    %v1076 = vpop.f32.mrb[0].mxu0
    %1077 = vmatprep.mubr.bf16.mxu0 %v793
    %1078 = vmatmul.mubr.bf16.gmra.mrb[0].mxu0 %v792
    %v1079 = vpop.f32.mrb[0].mxu0
    %v1080 = vadd.f32 %v875, %v1079
    %v1081 = vpop.f32.mrb[0].mxu0
    %v1082 = vpop.f32.mrb[0].mxu0
    %v1083 = vadd.f32 %v875, %v1082
    %v1084 = vpop.f32.mrb[0].mxu0
    %1085 = vmatprep.mubr.bf16.mxu0 %v795
    %1086 = vmatmul.mubr.bf16.gmra.mrb[0].mxu0 %v794
    %v1087 = vpop.f32.mrb[0].mxu0
    %v1088 = vadd.f32 %v875, %v1087
    %v1089 = vpop.f32.mrb[0].mxu0
    %v1090 = vpop.f32.mrb[0].mxu0
    %v1091 = vadd.f32 %v875, %v1090
    %v1092 = vpop.f32.mrb[0].mxu0
    %1093 = vmatprep.mubr.bf16.mxu0 %v797
    %1094 = vmatmul.mubr.bf16.gmra.mrb[0].mxu0 %v796
    %v1095 = vpop.f32.mrb[0].mxu0
    %v1096 = vadd.f32 %v875, %v1095
    %v1097 = vpop.f32.mrb[0].mxu0
    %v1098 = vpop.f32.mrb[0].mxu0
    %v1099 = vadd.f32 %v875, %v1098
    %v1100 = vpop.f32.mrb[0].mxu0
    %1101 = vmatprep.mubr.bf16.mxu0 %v799
    %1102 = vmatmul.mubr.bf16.gmra.mrb[0].mxu0 %v798
    %v1103 = vpop.f32.mrb[0].mxu0
    %v1104 = vadd.f32 %v875, %v1103
    %v1105 = vpop.f32.mrb[0].mxu0
    %v1106 = vpop.f32.mrb[0].mxu0
    %v1107 = vadd.f32 %v875, %v1106
    %v1108 = vpop.f32.mrb[0].mxu0
    %1109 = vmatprep.mubr.bf16.mxu0 %v801
    %1110 = vmatmul.mubr.bf16.gmra.mrb[0].mxu0 %v800
    %v1111 = vpop.f32.mrb[0].mxu0
    %v1112 = vadd.f32 %v875, %v1111
    %v1113 = vpop.f32.mrb[0].mxu0
    %v1114 = vpop.f32.mrb[0].mxu0
    %v1115 = vadd.f32 %v875, %v1114
    %v1116 = vpop.f32.mrb[0].mxu0
    %1117 = vmatprep.mubr.bf16.mxu0 %v803
    %1118 = vmatmul.mubr.bf16.gmra.mrb[0].mxu0 %v802
    %v1119 = vpop.f32.mrb[0].mxu0
    %v1120 = vadd.f32 %v875, %v1119
    %v1121 = vpop.f32.mrb[0].mxu0
    %v1122 = vpop.f32.mrb[0].mxu0
    %v1123 = vadd.f32 %v875, %v1122
    %v1124 = vpop.f32.mrb[0].mxu0
    %1125 = vmatprep.mubr.bf16.mxu0 %v805
    %1126 = vmatmul.mubr.bf16.gmra.mrb[0].mxu0 %v804
    %v1127 = vpop.f32.mrb[0].mxu0
    %v1128 = vadd.f32 %v875, %v1127
    %v1129 = vpop.f32.mrb[0].mxu0
    %v1130 = vpop.f32.mrb[0].mxu0
    %v1131 = vadd.f32 %v875, %v1130
    %v1132 = vpop.f32.mrb[0].mxu0
    %1133 = vmatprep.mubr.bf16.mxu0 %v807
    %1134 = vmatmul.mubr.bf16.gmra.mrb[0].mxu0 %v806
    %v1135 = vpop.f32.mrb[0].mxu0
    %v1136 = vadd.f32 %v875, %v1135
    %v1137 = vpop.f32.mrb[0].mxu0
    %v1138 = vpop.f32.mrb[0].mxu0
    %v1139 = vadd.f32 %v875, %v1138
    %v1140 = vpop.f32.mrb[0].mxu0
    %1141 = vmatprep.mubr.bf16.mxu0 %v809
    %1142 = vmatmul.mubr.bf16.gmra.mrb[0].mxu0 %v808
    %v1143 = vpop.f32.mrb[0].mxu0
    %v1144 = vadd.f32 %v875, %v1143
    %v1145 = vpop.f32.mrb[0].mxu0
    %v1146 = vpop.f32.mrb[0].mxu0
    %v1147 = vadd.f32 %v875, %v1146
    %v1148 = vpop.f32.mrb[0].mxu0
    %1149 = vmatprep.mubr.bf16.mxu0 %v811
    %1150 = vmatmul.mubr.bf16.gmra.mrb[0].mxu0 %v810
    %v1151 = vpop.f32.mrb[0].mxu0
    %v1152 = vadd.f32 %v875, %v1151
    %v1153 = vpop.f32.mrb[0].mxu0
    %v1154 = vpop.f32.mrb[0].mxu0
    %v1155 = vadd.f32 %v875, %v1154
    %v1156 = vpop.f32.mrb[0].mxu0
    %1157 = vmatprep.mubr.bf16.mxu0 %v813
    %1158 = vmatmul.mubr.bf16.gmra.mrb[0].mxu0 %v812
    %v1159 = vpop.f32.mrb[0].mxu0
    %v1160 = vadd.f32 %v875, %v1159
    %v1161 = vpop.f32.mrb[0].mxu0
    %v1162 = vpop.f32.mrb[0].mxu0
    %v1163 = vadd.f32 %v875, %v1162
    %v1164 = vpop.f32.mrb[0].mxu0
    %1165 = vmatprep.mubr.bf16.mxu0 %v815
    %1166 = vmatmul.mubr.bf16.gmra.mrb[0].mxu0 %v814
    %v1167 = vpop.f32.mrb[0].mxu0
    %v1168 = vadd.f32 %v875, %v1167
    %v1169 = vpop.f32.mrb[0].mxu0
    %v1170 = vpop.f32.mrb[0].mxu0
    %v1171 = vadd.f32 %v875, %v1170
    %v1172 = vpop.f32.mrb[0].mxu0
    %1173 = vmatprep.mubr.bf16.mxu0 %v817
    %1174 = vmatmul.mubr.bf16.gmra.mrb[0].mxu0 %v816
    %v1175 = vpop.f32.mrb[0].mxu0
    %v1176 = vadd.f32 %v875, %v1175
    %v1177 = vpop.f32.mrb[0].mxu0
    %v1178 = vpop.f32.mrb[0].mxu0
    %v1179 = vadd.f32 %v875, %v1178
    %v1180 = vpop.f32.mrb[0].mxu0
    %1181 = vmatprep.mubr.bf16.mxu0 %v819
    %1182 = vmatmul.mubr.bf16.gmra.mrb[0].mxu0 %v818
    %v1183 = vpop.f32.mrb[0].mxu0
    %v1184 = vadd.f32 %v875, %v1183
    %v1185 = vpop.f32.mrb[0].mxu0
    %v1186 = vpop.f32.mrb[0].mxu0
    %v1187 = vadd.f32 %v875, %v1186
    %v1188 = vpop.f32.mrb[0].mxu0
    %1189 = vmatprep.mubr.bf16.mxu0 %v821
    %1190 = vmatmul.mubr.bf16.gmra.mrb[0].mxu0 %v820
    %v1191 = vpop.f32.mrb[0].mxu0
    %v1192 = vadd.f32 %v875, %v1191
    %v1193 = vpop.f32.mrb[0].mxu0
    %v1194 = vpop.f32.mrb[0].mxu0
    %v1195 = vadd.f32 %v875, %v1194
    %v1196 = vpop.f32.mrb[0].mxu0
    %1197 = vmatprep.mubr.bf16.mxu0 %v823
    %1198 = vmatmul.mubr.bf16.gmra.mrb[0].mxu0 %v822
    %v1199 = vpop.f32.mrb[0].mxu0
    %v1200 = vadd.f32 %v875, %v1199
    %v1201 = vpop.f32.mrb[0].mxu0
    %v1202 = vpop.f32.mrb[0].mxu0
    %v1203 = vadd.f32 %v875, %v1202
    %v1204 = vpop.f32.mrb[0].mxu0
    %1205 = vmatprep.mubr.bf16.mxu0 %v825
    %1206 = vmatmul.mubr.bf16.gmra.mrb[0].mxu0 %v824
    %v1207 = vpop.f32.mrb[0].mxu0
    %v1208 = vadd.f32 %v875, %v1207
    %v1209 = vpop.f32.mrb[0].mxu0
    %v1210 = vpop.f32.mrb[0].mxu0
    %v1211 = vadd.f32 %v875, %v1210
    %v1212 = vpop.f32.mrb[0].mxu0
    %1213 = vmatprep.mubr.bf16.mxu0 %v827
    %1214 = vmatmul.mubr.bf16.gmra.mrb[0].mxu0 %v826
    %v1215 = vpop.f32.mrb[0].mxu0
    %v1216 = vadd.f32 %v875, %v1215
    %v1217 = vpop.f32.mrb[0].mxu0
    %v1218 = vpop.f32.mrb[0].mxu0
    %v1219 = vadd.f32 %v875, %v1218
    %v1220 = vpop.f32.mrb[0].mxu0
    %1221 = vmatprep.mubr.bf16.mxu0 %v829
    %1222 = vmatmul.mubr.bf16.gmra.mrb[0].mxu0 %v828
    %v1223 = vpop.f32.mrb[0].mxu0
    %v1224 = vadd.f32 %v875, %v1223
    %v1225 = vpop.f32.mrb[0].mxu0
    %v1226 = vpop.f32.mrb[0].mxu0
    %v1227 = vadd.f32 %v875, %v1226
    %v1228 = vpop.f32.mrb[0].mxu0
    %1229 = vmatprep.mubr.bf16.mxu0 %v831
    %1230 = vmatmul.mubr.bf16.gmra.mrb[0].mxu0 %v830
    %v1231 = vpop.f32.mrb[0].mxu0
    %v1232 = vadd.f32 %v875, %v1231
    %v1233 = vpop.f32.mrb[0].mxu0
    %v1234 = vpop.f32.mrb[0].mxu0
    %v1235 = vadd.f32 %v875, %v1234
    %v1236 = vpop.f32.mrb[0].mxu0
    %1237 = vmatprep.mubr.bf16.mxu0 %v833
    %1238 = vmatmul.mubr.bf16.gmra.mrb[0].mxu0 %v832
    %v1239 = vpop.f32.mrb[0].mxu0
    %v1240 = vadd.f32 %v875, %v1239
    %v1241 = vpop.f32.mrb[0].mxu0
    %v1242 = vpop.f32.mrb[0].mxu0
    %v1243 = vadd.f32 %v875, %v1242
    %v1244 = vpop.f32.mrb[0].mxu0
    %1245 = vmatprep.mubr.bf16.mxu0 %v835
    %1246 = vmatmul.mubr.bf16.gmra.mrb[0].mxu0 %v834
    %v1247 = vpop.f32.mrb[0].mxu0
    %v1248 = vadd.f32 %v875, %v1247
    %v1249 = vpop.f32.mrb[0].mxu0
    %v1250 = vpop.f32.mrb[0].mxu0
    %v1251 = vadd.f32 %v875, %v1250
    %v1252 = vpop.f32.mrb[0].mxu0
    %1253 = vmatprep.mubr.bf16.mxu0 %v837
    %1254 = vmatmul.mubr.bf16.gmra.mrb[0].mxu0 %v836
    %v1255 = vpop.f32.mrb[0].mxu0
    %v1256 = vadd.f32 %v875, %v1255
    %v1257 = vpop.f32.mrb[0].mxu0
    %v1258 = vpop.f32.mrb[0].mxu0
    %v1259 = vadd.f32 %v875, %v1258
    %v1260 = vpop.f32.mrb[0].mxu0
    %1261 = vdwg.mxu0
    %1262 = vst [vmem:[#allocation8] sm:$0xff] %v1008
    %1263 = vst [vmem:[#allocation8 + $0x8] sm:$0xff] %v1011
    %1264 = vst [vmem:[#allocation8 + $0x10] sm:$0xff] %v1016
    %1265 = vst [vmem:[#allocation8 + $0x18] sm:$0xff] %v1019
    %1266 = vst [vmem:[#allocation8 + $0x20] sm:$0xff] %v1024
    %1267 = vst [vmem:[#allocation8 + $0x28] sm:$0xff] %v1027
    %1268 = vst [vmem:[#allocation8 + $0x30] sm:$0xff] %v1032
    %1269 = vst [vmem:[#allocation8 + $0x38] sm:$0xff] %v1035
    %1270 = vst [vmem:[#allocation8 + $0x40] sm:$0xff] %v1040
    %1271 = vst [vmem:[#allocation8 + $0x48] sm:$0xff] %v1043
    %1272 = vst [vmem:[#allocation8 + $0x50] sm:$0xff] %v1048
    %1273 = vst [vmem:[#allocation8 + $0x58] sm:$0xff] %v1051
    %1274 = vst [vmem:[#allocation8 + $0x60] sm:$0xff] %v1056
    %1275 = vst [vmem:[#allocation8 + $0x68] sm:$0xff] %v1059
    %1276 = vst [vmem:[#allocation8 + $0x70] sm:$0xff] %v1064
    %1277 = vst [vmem:[#allocation8 + $0x78] sm:$0xff] %v1067
    %1278 = vst [vmem:[#allocation8 + $0x80] sm:$0xff] %v1072
    %1279 = vst [vmem:[#allocation8 + $0x88] sm:$0xff] %v1075
    %1280 = vst [vmem:[#allocation8 + $0x90] sm:$0xff] %v1080
    %1281 = vst [vmem:[#allocation8 + $0x98] sm:$0xff] %v1083
    %1282 = vst [vmem:[#allocation8 + $0xa0] sm:$0xff] %v1088
    %1283 = vst [vmem:[#allocation8 + $0xa8] sm:$0xff] %v1091
    %1284 = vst [vmem:[#allocation8 + $0xb0] sm:$0xff] %v1096
    %1285 = vst [vmem:[#allocation8 + $0xb8] sm:$0xff] %v1099
    %1286 = vst [vmem:[#allocation8 + $0xc0] sm:$0xff] %v1104
    %1287 = vst [vmem:[#allocation8 + $0xc8] sm:$0xff] %v1107
    %1288 = vst [vmem:[#allocation8 + $0xd0] sm:$0xff] %v1112
    %1289 = vst [vmem:[#allocation8 + $0xd8] sm:$0xff] %v1115
    %1290 = vst [vmem:[#allocation8 + $0xe0] sm:$0xff] %v1120
    %1291 = vst [vmem:[#allocation8 + $0xe8] sm:$0xff] %v1123
    %1292 = vst [vmem:[#allocation8 + $0xf0] sm:$0xff] %v1128
    %1293 = vst [vmem:[#allocation8 + $0xf8] sm:$0xff] %v1131
    %1294 = vst [vmem:[#allocation8 + $0x100] sm:$0xff] %v1136
    %1295 = vst [vmem:[#allocation8 + $0x108] sm:$0xff] %v1139
    %1296 = vst [vmem:[#allocation8 + $0x110] sm:$0xff] %v1144
    %1297 = vst [vmem:[#allocation8 + $0x118] sm:$0xff] %v1147
    %1298 = vst [vmem:[#allocation8 + $0x120] sm:$0xff] %v1152
    %1299 = vst [vmem:[#allocation8 + $0x128] sm:$0xff] %v1155
    %1300 = vst [vmem:[#allocation8 + $0x130] sm:$0xff] %v1160
    %1301 = vst [vmem:[#allocation8 + $0x138] sm:$0xff] %v1163
    %1302 = vst [vmem:[#allocation8 + $0x140] sm:$0xff] %v1168
    %1303 = vst [vmem:[#allocation8 + $0x148] sm:$0xff] %v1171
    %1304 = vst [vmem:[#allocation8 + $0x150] sm:$0xff] %v1176
    %1305 = vst [vmem:[#allocation8 + $0x158] sm:$0xff] %v1179
    %1306 = vst [vmem:[#allocation8 + $0x160] sm:$0xff] %v1184
    %1307 = vst [vmem:[#allocation8 + $0x168] sm:$0xff] %v1187
    %1308 = vst [vmem:[#allocation8 + $0x170] sm:$0xff] %v1192
    %1309 = vst [vmem:[#allocation8 + $0x178] sm:$0xff] %v1195
    %1310 = vst [vmem:[#allocation8 + $0x180] sm:$0xff] %v1200
    %1311 = vst [vmem:[#allocation8 + $0x188] sm:$0xff] %v1203
    %1312 = vst [vmem:[#allocation8 + $0x190] sm:$0xff] %v1208
    %1313 = vst [vmem:[#allocation8 + $0x198] sm:$0xff] %v1211
    %1314 = vst [vmem:[#allocation8 + $0x1a0] sm:$0xff] %v1216
    %1315 = vst [vmem:[#allocation8 + $0x1a8] sm:$0xff] %v1219
    %1316 = vst [vmem:[#allocation8 + $0x1b0] sm:$0xff] %v1224
    %1317 = vst [vmem:[#allocation8 + $0x1b8] sm:$0xff] %v1227
    %1318 = vst [vmem:[#allocation8 + $0x1c0] sm:$0xff] %v1232
    %1319 = vst [vmem:[#allocation8 + $0x1c8] sm:$0xff] %v1235
    %1320 = vst [vmem:[#allocation8 + $0x1d0] sm:$0xff] %v1240
    %1321 = vst [vmem:[#allocation8 + $0x1d8] sm:$0xff] %v1243
    %1322 = vst [vmem:[#allocation8 + $0x1e0] sm:$0xff] %v1248
    %1323 = vst [vmem:[#allocation8 + $0x1e8] sm:$0xff] %v1251
    %1324 = vst [vmem:[#allocation8 + $0x1f0] sm:$0xff] %v1256
    %1325 = vst [vmem:[#allocation8 + $0x1f8] sm:$0xff] %v1259
    // Predicated region
    $region34: #{tpu_custom_call.1} parent=1 // pred_check
      _
    $region35: #{tpu_custom_call.1} parent=1 // pred_check_branch
      %1327 = sbr.rel (0) target = $region37
    $region36: #{tpu_custom_call.1} parent=1 // pred_region
      %s1329 = ssub.s32 8192, 8192
      %1330 = vsyncadd [#allocation4], %s1329
      %s1331 = sshll.u32 [#allocation8], 4
      %s1332 = int_to_ptr.vmem [resolvable:$true] %s1331
      %1337 = dma.vmem_to_hbm [thread:$0]  %s1332, 8192, %s5, [#allocation4], 128, 128, 8
    $region37: #{tpu_custom_call.1} parent=1 // pred_fallthru
      _
    // Predicated region
    $region38: #{tpu_custom_call.1} parent=1 // pred_check
      _
    $region39: #{tpu_custom_call.1} parent=1 // pred_check_branch
      %1339 = sbr.rel (0) target = $region41
    $region40: #{tpu_custom_call.1} parent=1 // pred_region
      %1340 = dma.done [#allocation4], 8192
    $region41: #{tpu_custom_call.1} parent=1 // pred_fallthru
      _
    %1341 = vsyncpa [#allocation3], 1
    %1342 = vsyncpa [#allocation6], 1
    %1343 = vsyncpa [#allocation4], 1

</llo_original>
